<compile_context>
chip_gen: v7x
topology: tpu7x:2x2x1
jax: 0.10.0
libtpu: 0.0.40
codegen_flags: <defaults>
</compile_context>

<pallas_src>
import functools
import math

import jax
import jax.numpy as jnp
from jax import lax
from jax.experimental import pallas as pl
from jax.experimental.pallas import tpu as pltpu


def _attn_kernel(x_ref, wq_ref, wk_ref, wv_ref, bq_ref, bk_ref, bv_ref, wo_ref,
                 o_ref, kc_ref, vc_ref, acc_ref,
                 *, heads_per_group, head_dim, q_tile):
    # Grid = (batch, q_block, head_group); group is the output-accumulation axis.
    qi = pl.program_id(1)
    gr = pl.program_id(2)

    # ---- K/V projection for this head group: once per batch element. --------
    # Cached in persistent VMEM scratch and reused by every query tile, so the
    # two largest projection GEMMs are never redone across qi.
    @pl.when(qi == 0)
    def _():
        x_full = x_ref[0]                                               # (S, H) bf16
        k = jnp.dot(x_full, wk_ref[0], preferred_element_type=jnp.float32) + bk_ref[0]
        v = jnp.dot(x_full, wv_ref[0], preferred_element_type=jnp.float32) + bv_ref[0]
        kc_ref[gr] = k.astype(kc_ref.dtype)                             # (S, g*d)
        vc_ref[gr] = v.astype(vc_ref.dtype)

    @pl.when(gr == 0)
    def _():
        acc_ref[...] = jnp.zeros_like(acc_ref)

    # ---- Q projection for the current query tile only. ----------------------
    # Query rows are sliced out of the already-resident full-sequence block
    # (no second DMA stream / duplicate buffer for xq).
    row0 = pl.multiple_of(qi * q_tile, q_tile)
    xq = x_ref[0, pl.ds(row0, q_tile), :]                               # (tq, H) bf16

    # Lane-dense projection: N = heads_per_group * head_dim.  1/sqrt(d) is
    # folded into wq/bq on the host, so no extra scale multiply here.
    q = jnp.dot(xq, wq_ref[0], preferred_element_type=jnp.float32) + bq_ref[0]
    q = q.astype(jnp.bfloat16)                                          # (tq, g*d)
    k = kc_ref[gr]                                                      # (S,  g*d) bf16
    v = vc_ref[gr]

    # ---- Per-head attention inside the group (static unroll). ---------------
    outs = []
    for h in range(heads_per_group):
        c = h * head_dim
        q_h = q[:, c:c + head_dim]                                      # (tq, d)
        k_h = k[:, c:c + head_dim]                                      # (S, d)
        v_h = v[:, c:c + head_dim]                                      # (S, d)
        # scores: contract head dims directly ('sd,td->st') -> no transpose.
        s = lax.dot_general(q_h, k_h, (((1,), (1,)), ((), ())),
                            preferred_element_type=jnp.float32)         # (tq, S)
        # Numerically-stable f32 softmax; divide goes to the (idle) EUP.
        s = s - jnp.max(s, axis=-1, keepdims=True)
        p = jnp.exp(s)
        p = p * pl.reciprocal(jnp.sum(p, axis=-1, keepdims=True), approx=True)
        outs.append(jnp.dot(p.astype(jnp.bfloat16), v_h,
                            preferred_element_type=jnp.float32))        # (tq, d)

    # Concatenate the group's heads and do ONE lane-dense output-projection
    # GEMM (K = g*d) accumulated into the f32 output accumulator.
    attn = jnp.concatenate(outs, axis=-1).astype(jnp.bfloat16)          # (tq, g*d)
    acc_ref[...] += jnp.dot(attn, wo_ref[0], preferred_element_type=jnp.float32)

    @pl.when(gr == pl.num_programs(2) - 1)
    def _():
        o_ref[0] = acc_ref[...].astype(o_ref.dtype)


def _pick_q_tile(seq_len, max_tile=256):
    """Largest query tile <= max_tile dividing S; prefer multiples of 128, then 8."""
    if seq_len <= max_tile:
        return seq_len
    for step in (128, 8):
        t = (max_tile // step) * step
        while t >= step:
            if seq_len % t == 0:
                return t
            t -= step
    # TODO(synk): pad / mask ragged sequence lengths instead of a full-S block.
    return seq_len


def _heads_per_group(num_heads, head_dim, target_width=256):
    """Largest divisor g of num_heads such that g*head_dim <= target_width."""
    best = 1
    for g in range(1, num_heads + 1):
        if num_heads % g == 0 and g * head_dim <= target_width:
            best = g
    return best


def base_attention_forward(hidden_states, wqkv, bqkv, wo, *, num_heads,
                           compute_dtype=jnp.bfloat16):
    """hidden_states: (B, S, H); wqkv: (3H, H) [out,in]; bqkv: (3H,); wo: (H, H)."""
    B, S, H = hidden_states.shape
    nh = num_heads
    d = H // nh
    assert d * nh == H, "hidden_size must be divisible by num_heads"

    g = _heads_per_group(nh, d)          # heads per lane-dense group
    gd = g * d
    n_groups = nh // g

    tq = _pick_q_tile(S)
    n_q = S // tq

    scale = 1.0 / math.sqrt(d)

    # ---- host-side prep (once): bf16 activations, pre-transposed / grouped
    # weights, scale folded into Wq/bq -> no in-kernel transposes or rescaling.
    x = hidden_states.astype(compute_dtype)

    wq, wk, wv = wqkv[0 * H:1 * H], wqkv[1 * H:2 * H], wqkv[2 * H:3 * H]
    bq, bk, bv = bqkv[0 * H:1 * H], bqkv[1 * H:2 * H], bqkv[2 * H:3 * H]

    def _group_t(w):                      # (H_out, H_in) -> (n_groups, H_in, g*d)
        return w.reshape(n_groups, gd, H).transpose(0, 2, 1)

    wq_g = (_group_t(wq) * scale).astype(compute_dtype)
    wk_g = _group_t(wk).astype(compute_dtype)
    wv_g = _group_t(wv).astype(compute_dtype)
    bq_g = (bq * scale).reshape(n_groups, 1, gd).astype(jnp.float32)
    bk_g = bk.reshape(n_groups, 1, gd).astype(jnp.float32)
    bv_g = bv.reshape(n_groups, 1, gd).astype(jnp.float32)
    wo_g = wo.T.reshape(n_groups, gd, H).astype(compute_dtype)   # rows of Wo^T per group

    kernel = functools.partial(_attn_kernel, heads_per_group=g, head_dim=d, q_tile=tq)
    group_map = lambda b, qi, gr: (gr, 0, 0)

    flops = (2 * B * S * H * 3 * H          # qkv projection
             + 4 * B * nh * S * S * d       # scores + PV
             + 2 * B * S * H * H)           # output projection
    bytes_accessed = (2 * B * S * H * 2     # x (bf16) in + out (f32 counted below)
                      + 4 * H * H * 2       # weights (bf16)
                      + 3 * H * 4
                      + B * S * H * 4)
    cost = pl.CostEstimate(flops=flops, transcendentals=B * nh * S * S,
                           bytes_accessed=bytes_accessed)

    return pl.pallas_call(
        kernel,
        out_shape=jax.ShapeDtypeStruct((B, S, H), hidden_states.dtype),
        grid_spec=pltpu.PrefetchScalarGridSpec(
            num_scalar_prefetch=0,
            grid=(B, n_q, n_groups),
            in_specs=[
                pl.BlockSpec((1, S, H), lambda b, qi, gr: (b, 0, 0)),   # activations (bf16)
                pl.BlockSpec((1, H, gd), group_map),                    # Wq^T (scaled) per group
                pl.BlockSpec((1, H, gd), group_map),                    # Wk^T per group
                pl.BlockSpec((1, H, gd), group_map),                    # Wv^T per group
                pl.BlockSpec((1, 1, gd), group_map),                    # bq (scaled) per group
                pl.BlockSpec((1, 1, gd), group_map),                    # bk per group
                pl.BlockSpec((1, 1, gd), group_map),                    # bv per group
                pl.BlockSpec((1, gd, H), group_map),                    # Wo^T rows per group
            ],
            out_specs=pl.BlockSpec((1, tq, H), lambda b, qi, gr: (b, qi, 0)),
            scratch_shapes=[
                pltpu.VMEM((n_groups, S, gd), compute_dtype),           # K cache (per batch elem)
                pltpu.VMEM((n_groups, S, gd), compute_dtype),           # V cache (per batch elem)
                pltpu.VMEM((tq, H), jnp.float32),                       # output accumulator
            ],
        ),
        compiler_params=pltpu.CompilerParams(
            # batch shards across TensorCores; qi/group must stay on one core
            # because the K/V cache and output accumulator carry state across them.
            dimension_semantics=("parallel", "arbitrary", "arbitrary"),
            vmem_limit_bytes=64 * 1024 * 1024,
        ),
        cost_estimate=cost,
    )(x, wq_g, wk_g, wv_g, bq_g, bk_g, bv_g, wo_g)


def _reference(hidden_states, wqkv, bqkv, wo, *, num_heads):
    B, S, H = hidden_states.shape
    d = H // num_heads
    qkv = hidden_states @ wqkv.T + bqkv
    q, k, v = jnp.split(qkv, 3, axis=-1)

    def heads(t):  # (B, S, H) -> (B, nh, S, d)
        return t.reshape(B, S, num_heads, d).transpose(0, 2, 1, 3)

    q, k, v = heads(q), heads(k), heads(v)
    s = jnp.einsum("bhqd,bhkd->bhqk", q, k / math.sqrt(d))
    p = jax.nn.softmax(s.astype(jnp.float32), axis=-1).astype(q.dtype)
    o = jnp.einsum("bhqk,bhkd->bhqd", p, v)
    o = o.transpose(0, 2, 1, 3).reshape(B, S, H)
    return o @ wo.T


if __name__ == "__main__":
    # Config: hidden_size=32, num_attention_heads=4 (head_dim=8), use_qkv_bias=True,
    # use_rope=False.  Small shapes: batch=2, seq=8.
    B, S, H, NH = 2, 8, 32, 4
    key = jax.random.PRNGKey(0)
    k1, k2, k3, k4 = jax.random.split(key, 4)

    init_std = 0.02
    x = jax.random.normal(k1, (B, S, H), dtype=jnp.float32)
    wqkv = (init_std * jax.random.normal(k2, (3 * H, H))).astype(jnp.float32)
    bqkv = (init_std * jax.random.normal(k4, (3 * H,))).astype(jnp.float32)
    wo = (init_std * jax.random.normal(k3, (H, H))).astype(jnp.float32)

    out = base_attention_forward(x, wqkv, bqkv, wo, num_heads=NH)
    out = jax.block_until_ready(out)

    ref = _reference(x, wqkv, bqkv, wo, num_heads=NH)
    assert out.shape == (B, S, H)
    # bf16 MXU dots + approx reciprocal -> modestly looser tolerance than pure-f32.
    assert jnp.allclose(out, ref, atol=2e-3, rtol=5e-2), (
        f"mismatch vs reference, max abs err = {float(jnp.max(jnp.abs(out - ref)))}")

    print("KERNEL_OK")
</pallas_src>

<mosaic_0001>
module attributes {stable_mosaic.version = 11 : i64} {
  func.func @_attn_kernel(%arg0: i32, %arg1: i32, %arg2: i32, %arg3: memref<1x8x32xbf16, #tpu.memory_space<vmem>>, %arg4: memref<1x32x32xbf16, #tpu.memory_space<vmem>>, %arg5: memref<1x32x32xbf16, #tpu.memory_space<vmem>>, %arg6: memref<1x32x32xbf16, #tpu.memory_space<vmem>>, %arg7: memref<1x1x32xf32, #tpu.memory_space<vmem>>, %arg8: memref<1x1x32xf32, #tpu.memory_space<vmem>>, %arg9: memref<1x1x32xf32, #tpu.memory_space<vmem>>, %arg10: memref<1x32x32xbf16, #tpu.memory_space<vmem>>, %arg11: memref<1x8x32xf32, #tpu.memory_space<vmem>>, %arg12: memref<1x8x32xbf16, #tpu.memory_space<vmem>>, %arg13: memref<1x8x32xbf16, #tpu.memory_space<vmem>>, %arg14: memref<8x32xf32, #tpu.memory_space<vmem>>) attributes {dimension_semantics = [#tpu.dimension_semantics<parallel>, #tpu.dimension_semantics<arbitrary>, #tpu.dimension_semantics<arbitrary>], iteration_bounds = array<i64: 2, 1, 1>, scalar_prefetch = 0 : i64, scratch_operands = 3 : i64, tpu.core_type = #tpu.core_type<tc>, window_params = [{transform_indices = @transform_0, window_bounds = array<i64: 1, 8, 32>}, {transform_indices = @transform_1, window_bounds = array<i64: 1, 32, 32>}, {transform_indices = @transform_2, window_bounds = array<i64: 1, 32, 32>}, {transform_indices = @transform_3, window_bounds = array<i64: 1, 32, 32>}, {transform_indices = @transform_4, window_bounds = array<i64: 1, 1, 32>}, {transform_indices = @transform_5, window_bounds = array<i64: 1, 1, 32>}, {transform_indices = @transform_6, window_bounds = array<i64: 1, 1, 32>}, {transform_indices = @transform_7, window_bounds = array<i64: 1, 32, 32>}, {transform_indices = @transform_8, window_bounds = array<i64: 1, 8, 32>}]} {
    %c0_i32 = arith.constant 0 : i32
    %0 = arith.cmpi eq, %arg1, %c0_i32 : i32
    %1 = arith.extui %0 : i1 to i32
    %c0_i32_0 = arith.constant 0 : i32
    %2 = arith.cmpi ne, %1, %c0_i32_0 : i32
    scf.if %2 {
      %c0_40 = arith.constant 0 : index
      %c0_41 = arith.constant 0 : index
      %c0_42 = arith.constant 0 : index
      %100 = vector.load %arg3[%c0_40, %c0_41, %c0_42] : memref<1x8x32xbf16, #tpu.memory_space<vmem>>, vector<1x8x32xbf16>
      %101 = vector.shape_cast %100 : vector<1x8x32xbf16> to vector<8x32xbf16>
      %c0_43 = arith.constant 0 : index
      %c0_44 = arith.constant 0 : index
      %c0_45 = arith.constant 0 : index
      %102 = vector.load %arg5[%c0_43, %c0_44, %c0_45] : memref<1x32x32xbf16, #tpu.memory_space<vmem>>, vector<1x32x32xbf16>
      %103 = vector.shape_cast %102 : vector<1x32x32xbf16> to vector<32x32xbf16>
      %cst_46 = arith.constant dense<0.000000e+00> : vector<8x32xf32>
      %104 = tpu.matmul %101, %103, %cst_46 {dimension_numbers = #tpu.dot_dimension_numbers<[1], [0], [0], [1], [0, 0, 1, 1], [], []>} : vector<8x32xbf16>, vector<32x32xbf16>, vector<8x32xf32> -> vector<8x32xf32>
      %c0_47 = arith.constant 0 : index
      %c0_48 = arith.constant 0 : index
      %c0_49 = arith.constant 0 : index
      %105 = vector.load %arg8[%c0_47, %c0_48, %c0_49] : memref<1x1x32xf32, #tpu.memory_space<vmem>>, vector<1x1x32xf32>
      %106 = vector.shape_cast %105 : vector<1x1x32xf32> to vector<1x32xf32>
      %107 = vector.broadcast %106 : vector<1x32xf32> to vector<8x32xf32>
      %108 = arith.addf %104, %107 : vector<8x32xf32>
      %c0_50 = arith.constant 0 : index
      %c0_51 = arith.constant 0 : index
      %c0_52 = arith.constant 0 : index
      %109 = vector.load %arg6[%c0_50, %c0_51, %c0_52] : memref<1x32x32xbf16, #tpu.memory_space<vmem>>, vector<1x32x32xbf16>
      %110 = vector.shape_cast %109 : vector<1x32x32xbf16> to vector<32x32xbf16>
      %cst_53 = arith.constant dense<0.000000e+00> : vector<8x32xf32>
      %111 = tpu.matmul %101, %110, %cst_53 {dimension_numbers = #tpu.dot_dimension_numbers<[1], [0], [0], [1], [0, 0, 1, 1], [], []>} : vector<8x32xbf16>, vector<32x32xbf16>, vector<8x32xf32> -> vector<8x32xf32>
      %c0_54 = arith.constant 0 : index
      %c0_55 = arith.constant 0 : index
      %c0_56 = arith.constant 0 : index
      %112 = vector.load %arg9[%c0_54, %c0_55, %c0_56] : memref<1x1x32xf32, #tpu.memory_space<vmem>>, vector<1x1x32xf32>
      %113 = vector.shape_cast %112 : vector<1x1x32xf32> to vector<1x32xf32>
      %114 = vector.broadcast %113 : vector<1x32xf32> to vector<8x32xf32>
      %115 = arith.addf %111, %114 : vector<8x32xf32>
      %116 = arith.truncf %108 : vector<8x32xf32> to vector<8x32xbf16>
      %117 = arith.index_cast %arg2 : i32 to index
      %c0_57 = arith.constant 0 : index
      %c0_58 = arith.constant 0 : index
      %118 = vector.load %arg12[%117, %c0_57, %c0_58] : memref<1x8x32xbf16, #tpu.memory_space<vmem>>, vector<1x8x32xbf16>
      %119 = vector.shape_cast %118 : vector<1x8x32xbf16> to vector<8x32xbf16>
      %120 = vector.shape_cast %116 : vector<8x32xbf16> to vector<1x8x32xbf16>
      tpu.vector_store %arg12[%117, %c0_57, %c0_58], %120 {strides = array<i32>} : memref<1x8x32xbf16, #tpu.memory_space<vmem>>, vector<1x8x32xbf16>,
      %121 = arith.truncf %115 : vector<8x32xf32> to vector<8x32xbf16>
      %122 = arith.index_cast %arg2 : i32 to index
      %c0_59 = arith.constant 0 : index
      %c0_60 = arith.constant 0 : index
      %123 = vector.load %arg13[%122, %c0_59, %c0_60] : memref<1x8x32xbf16, #tpu.memory_space<vmem>>, vector<1x8x32xbf16>
      %124 = vector.shape_cast %123 : vector<1x8x32xbf16> to vector<8x32xbf16>
      %125 = vector.shape_cast %121 : vector<8x32xbf16> to vector<1x8x32xbf16>
      tpu.vector_store %arg13[%122, %c0_59, %c0_60], %125 {strides = array<i32>} : memref<1x8x32xbf16, #tpu.memory_space<vmem>>, vector<1x8x32xbf16>,
    } else {
    }
    %c0_i32_1 = arith.constant 0 : i32
    %3 = arith.cmpi eq, %arg2, %c0_i32_1 : i32
    %4 = arith.extui %3 : i1 to i32
    %c0_i32_2 = arith.constant 0 : i32
    %5 = arith.cmpi ne, %4, %c0_i32_2 : i32
    scf.if %5 {
      %cst_40 = arith.constant 0.000000e+00 : f32
      %100 = vector.broadcast %cst_40 : f32 to vector<8x32xf32>
      %c0_41 = arith.constant 0 : index
      %c0_42 = arith.constant 0 : index
      %101 = vector.load %arg14[%c0_41, %c0_42] : memref<8x32xf32, #tpu.memory_space<vmem>>, vector<8x32xf32>
      tpu.vector_store %arg14[%c0_41, %c0_42], %100 {strides = array<i32>} : memref<8x32xf32, #tpu.memory_space<vmem>>, vector<8x32xf32>,
    } else {
    }
    %c8_i32 = arith.constant 8 : i32
    %6 = arith.muli %arg1, %c8_i32 : i32
    %7 = tpu.assume_multiple %6, 8 : i32
    %c0 = arith.constant 0 : index
    %8 = arith.index_cast %7 : i32 to index
    %c0_3 = arith.constant 0 : index
    %9 = vector.load %arg3[%c0, %8, %c0_3] : memref<1x8x32xbf16, #tpu.memory_space<vmem>>, vector<1x8x32xbf16>
    %10 = vector.shape_cast %9 : vector<1x8x32xbf16> to vector<8x32xbf16>
    %c0_4 = arith.constant 0 : index
    %c0_5 = arith.constant 0 : index
    %c0_6 = arith.constant 0 : index
    %11 = vector.load %arg4[%c0_4, %c0_5, %c0_6] : memref<1x32x32xbf16, #tpu.memory_space<vmem>>, vector<1x32x32xbf16>
    %12 = vector.shape_cast %11 : vector<1x32x32xbf16> to vector<32x32xbf16>
    %cst = arith.constant dense<0.000000e+00> : vector<8x32xf32>
    %13 = tpu.matmul %10, %12, %cst {dimension_numbers = #tpu.dot_dimension_numbers<[1], [0], [0], [1], [0, 0, 1, 1], [], []>} : vector<8x32xbf16>, vector<32x32xbf16>, vector<8x32xf32> -> vector<8x32xf32>
    %c0_7 = arith.constant 0 : index
    %c0_8 = arith.constant 0 : index
    %c0_9 = arith.constant 0 : index
    %14 = vector.load %arg7[%c0_7, %c0_8, %c0_9] : memref<1x1x32xf32, #tpu.memory_space<vmem>>, vector<1x1x32xf32>
    %15 = vector.shape_cast %14 : vector<1x1x32xf32> to vector<1x32xf32>
    %16 = vector.broadcast %15 : vector<1x32xf32> to vector<8x32xf32>
    %17 = arith.addf %13, %16 : vector<8x32xf32>
    %18 = arith.truncf %17 : vector<8x32xf32> to vector<8x32xbf16>
    %19 = arith.index_cast %arg2 : i32 to index
    %c0_10 = arith.constant 0 : index
    %c0_11 = arith.constant 0 : index
    %20 = vector.load %arg12[%19, %c0_10, %c0_11] : memref<1x8x32xbf16, #tpu.memory_space<vmem>>, vector<1x8x32xbf16>
    %21 = vector.shape_cast %20 : vector<1x8x32xbf16> to vector<8x32xbf16>
    %22 = arith.index_cast %arg2 : i32 to index
    %c0_12 = arith.constant 0 : index
    %c0_13 = arith.constant 0 : index
    %23 = vector.load %arg13[%22, %c0_12, %c0_13] : memref<1x8x32xbf16, #tpu.memory_space<vmem>>, vector<1x8x32xbf16>
    %24 = vector.shape_cast %23 : vector<1x8x32xbf16> to vector<8x32xbf16>
    %25 = vector.extract_strided_slice %18 {offsets = [0, 0], sizes = [8, 8], strides = [1, 1]} : vector<8x32xbf16> to vector<8x8xbf16>
    %26 = vector.extract_strided_slice %21 {offsets = [0, 0], sizes = [8, 8], strides = [1, 1]} : vector<8x32xbf16> to vector<8x8xbf16>
    %27 = vector.extract_strided_slice %24 {offsets = [0, 0], sizes = [8, 8], strides = [1, 1]} : vector<8x32xbf16> to vector<8x8xbf16>
    %cst_14 = arith.constant dense<0.000000e+00> : vector<8x8xf32>
    %28 = tpu.matmul %25, %26, %cst_14 {dimension_numbers = #tpu.dot_dimension_numbers<[1], [1], [0], [0], [0, 0, 1, 0], [], []>} : vector<8x8xbf16>, vector<8x8xbf16>, vector<8x8xf32> -> vector<8x8xf32>
    %cst_15 = arith.constant dense<0xFF800000> : vector<8xf32>
    %29 = vector.multi_reduction <maximumf>, %28, %cst_15 [1] : vector<8x8xf32> to vector<8xf32>
    %30 = vector.shape_cast %29 : vector<8xf32> to vector<8x1xf32>
    %31 = vector.broadcast %30 : vector<8x1xf32> to vector<8x8xf32>
    %32 = arith.subf %28, %31 : vector<8x8xf32>
    %33 = math.exp %32 : vector<8x8xf32>
    %cst_16 = arith.constant dense<0.000000e+00> : vector<8xf32>
    %34 = vector.multi_reduction <add>, %33, %cst_16 [1] : vector<8x8xf32> to vector<8xf32>
    %35 = vector.shape_cast %34 : vector<8xf32> to vector<8x1xf32>
    %36 = tpu.reciprocal %35 {approx = true} : vector<8x1xf32> -> vector<8x1xf32>
    %37 = vector.broadcast %36 : vector<8x1xf32> to vector<8x8xf32>
    %38 = arith.mulf %33, %37 : vector<8x8xf32>
    %39 = arith.truncf %38 : vector<8x8xf32> to vector<8x8xbf16>
    %cst_17 = arith.constant dense<0.000000e+00> : vector<8x8xf32>
    %40 = tpu.matmul %39, %27, %cst_17 {dimension_numbers = #tpu.dot_dimension_numbers<[1], [0], [0], [1], [0, 0, 1, 1], [], []>} : vector<8x8xbf16>, vector<8x8xbf16>, vector<8x8xf32> -> vector<8x8xf32>
    %41 = vector.extract_strided_slice %18 {offsets = [0, 8], sizes = [8, 8], strides = [1, 1]} : vector<8x32xbf16> to vector<8x8xbf16>
    %42 = vector.extract_strided_slice %21 {offsets = [0, 8], sizes = [8, 8], strides = [1, 1]} : vector<8x32xbf16> to vector<8x8xbf16>
    %43 = vector.extract_strided_slice %24 {offsets = [0, 8], sizes = [8, 8], strides = [1, 1]} : vector<8x32xbf16> to vector<8x8xbf16>
    %cst_18 = arith.constant dense<0.000000e+00> : vector<8x8xf32>
    %44 = tpu.matmul %41, %42, %cst_18 {dimension_numbers = #tpu.dot_dimension_numbers<[1], [1], [0], [0], [0, 0, 1, 0], [], []>} : vector<8x8xbf16>, vector<8x8xbf16>, vector<8x8xf32> -> vector<8x8xf32>
    %cst_19 = arith.constant dense<0xFF800000> : vector<8xf32>
    %45 = vector.multi_reduction <maximumf>, %44, %cst_19 [1] : vector<8x8xf32> to vector<8xf32>
    %46 = vector.shape_cast %45 : vector<8xf32> to vector<8x1xf32>
    %47 = vector.broadcast %46 : vector<8x1xf32> to vector<8x8xf32>
    %48 = arith.subf %44, %47 : vector<8x8xf32>
    %49 = math.exp %48 : vector<8x8xf32>
    %cst_20 = arith.constant dense<0.000000e+00> : vector<8xf32>
    %50 = vector.multi_reduction <add>, %49, %cst_20 [1] : vector<8x8xf32> to vector<8xf32>
    %51 = vector.shape_cast %50 : vector<8xf32> to vector<8x1xf32>
    %52 = tpu.reciprocal %51 {approx = true} : vector<8x1xf32> -> vector<8x1xf32>
    %53 = vector.broadcast %52 : vector<8x1xf32> to vector<8x8xf32>
    %54 = arith.mulf %49, %53 : vector<8x8xf32>
    %55 = arith.truncf %54 : vector<8x8xf32> to vector<8x8xbf16>
    %cst_21 = arith.constant dense<0.000000e+00> : vector<8x8xf32>
    %56 = tpu.matmul %55, %43, %cst_21 {dimension_numbers = #tpu.dot_dimension_numbers<[1], [0], [0], [1], [0, 0, 1, 1], [], []>} : vector<8x8xbf16>, vector<8x8xbf16>, vector<8x8xf32> -> vector<8x8xf32>
    %57 = vector.extract_strided_slice %18 {offsets = [0, 16], sizes = [8, 8], strides = [1, 1]} : vector<8x32xbf16> to vector<8x8xbf16>
    %58 = vector.extract_strided_slice %21 {offsets = [0, 16], sizes = [8, 8], strides = [1, 1]} : vector<8x32xbf16> to vector<8x8xbf16>
    %59 = vector.extract_strided_slice %24 {offsets = [0, 16], sizes = [8, 8], strides = [1, 1]} : vector<8x32xbf16> to vector<8x8xbf16>
    %cst_22 = arith.constant dense<0.000000e+00> : vector<8x8xf32>
    %60 = tpu.matmul %57, %58, %cst_22 {dimension_numbers = #tpu.dot_dimension_numbers<[1], [1], [0], [0], [0, 0, 1, 0], [], []>} : vector<8x8xbf16>, vector<8x8xbf16>, vector<8x8xf32> -> vector<8x8xf32>
    %cst_23 = arith.constant dense<0xFF800000> : vector<8xf32>
    %61 = vector.multi_reduction <maximumf>, %60, %cst_23 [1] : vector<8x8xf32> to vector<8xf32>
    %62 = vector.shape_cast %61 : vector<8xf32> to vector<8x1xf32>
    %63 = vector.broadcast %62 : vector<8x1xf32> to vector<8x8xf32>
    %64 = arith.subf %60, %63 : vector<8x8xf32>
    %65 = math.exp %64 : vector<8x8xf32>
    %cst_24 = arith.constant dense<0.000000e+00> : vector<8xf32>
    %66 = vector.multi_reduction <add>, %65, %cst_24 [1] : vector<8x8xf32> to vector<8xf32>
    %67 = vector.shape_cast %66 : vector<8xf32> to vector<8x1xf32>
    %68 = tpu.reciprocal %67 {approx = true} : vector<8x1xf32> -> vector<8x1xf32>
    %69 = vector.broadcast %68 : vector<8x1xf32> to vector<8x8xf32>
    %70 = arith.mulf %65, %69 : vector<8x8xf32>
    %71 = arith.truncf %70 : vector<8x8xf32> to vector<8x8xbf16>
    %cst_25 = arith.constant dense<0.000000e+00> : vector<8x8xf32>
    %72 = tpu.matmul %71, %59, %cst_25 {dimension_numbers = #tpu.dot_dimension_numbers<[1], [0], [0], [1], [0, 0, 1, 1], [], []>} : vector<8x8xbf16>, vector<8x8xbf16>, vector<8x8xf32> -> vector<8x8xf32>
    %73 = vector.extract_strided_slice %18 {offsets = [0, 24], sizes = [8, 8], strides = [1, 1]} : vector<8x32xbf16> to vector<8x8xbf16>
    %74 = vector.extract_strided_slice %21 {offsets = [0, 24], sizes = [8, 8], strides = [1, 1]} : vector<8x32xbf16> to vector<8x8xbf16>
    %75 = vector.extract_strided_slice %24 {offsets = [0, 24], sizes = [8, 8], strides = [1, 1]} : vector<8x32xbf16> to vector<8x8xbf16>
    %cst_26 = arith.constant dense<0.000000e+00> : vector<8x8xf32>
    %76 = tpu.matmul %73, %74, %cst_26 {dimension_numbers = #tpu.dot_dimension_numbers<[1], [1], [0], [0], [0, 0, 1, 0], [], []>} : vector<8x8xbf16>, vector<8x8xbf16>, vector<8x8xf32> -> vector<8x8xf32>
    %cst_27 = arith.constant dense<0xFF800000> : vector<8xf32>
    %77 = vector.multi_reduction <maximumf>, %76, %cst_27 [1] : vector<8x8xf32> to vector<8xf32>
    %78 = vector.shape_cast %77 : vector<8xf32> to vector<8x1xf32>
    %79 = vector.broadcast %78 : vector<8x1xf32> to vector<8x8xf32>
    %80 = arith.subf %76, %79 : vector<8x8xf32>
    %81 = math.exp %80 : vector<8x8xf32>
    %cst_28 = arith.constant dense<0.000000e+00> : vector<8xf32>
    %82 = vector.multi_reduction <add>, %81, %cst_28 [1] : vector<8x8xf32> to vector<8xf32>
    %83 = vector.shape_cast %82 : vector<8xf32> to vector<8x1xf32>
    %84 = tpu.reciprocal %83 {approx = true} : vector<8x1xf32> -> vector<8x1xf32>
    %85 = vector.broadcast %84 : vector<8x1xf32> to vector<8x8xf32>
    %86 = arith.mulf %81, %85 : vector<8x8xf32>
    %87 = arith.truncf %86 : vector<8x8xf32> to vector<8x8xbf16>
    %cst_29 = arith.constant dense<0.000000e+00> : vector<8x8xf32>
    %88 = tpu.matmul %87, %75, %cst_29 {dimension_numbers = #tpu.dot_dimension_numbers<[1], [0], [0], [1], [0, 0, 1, 1], [], []>} : vector<8x8xbf16>, vector<8x8xbf16>, vector<8x8xf32> -> vector<8x8xf32>
    %89 = tpu.concatenate %40, %56, %72, %88 in 1 : vector<8x8xf32>, vector<8x8xf32>, vector<8x8xf32>, vector<8x8xf32> -> vector<8x32xf32>
    %90 = arith.truncf %89 : vector<8x32xf32> to vector<8x32xbf16>
    %c0_30 = arith.constant 0 : index
    %c0_31 = arith.constant 0 : index
    %91 = vector.load %arg14[%c0_30, %c0_31] : memref<8x32xf32, #tpu.memory_space<vmem>>, vector<8x32xf32>
    %c0_32 = arith.constant 0 : index
    %c0_33 = arith.constant 0 : index
    %c0_34 = arith.constant 0 : index
    %92 = vector.load %arg10[%c0_32, %c0_33, %c0_34] : memref<1x32x32xbf16, #tpu.memory_space<vmem>>, vector<1x32x32xbf16>
    %93 = vector.shape_cast %92 : vector<1x32x32xbf16> to vector<32x32xbf16>
    %cst_35 = arith.constant dense<0.000000e+00> : vector<8x32xf32>
    %94 = tpu.matmul %90, %93, %cst_35 {dimension_numbers = #tpu.dot_dimension_numbers<[1], [0], [0], [1], [0, 0, 1, 1], [], []>} : vector<8x32xbf16>, vector<32x32xbf16>, vector<8x32xf32> -> vector<8x32xf32>
    %95 = arith.addf %91, %94 : vector<8x32xf32>
    %c0_36 = arith.constant 0 : index
    %c0_37 = arith.constant 0 : index
    %96 = vector.load %arg14[%c0_36, %c0_37] : memref<8x32xf32, #tpu.memory_space<vmem>>, vector<8x32xf32>
    tpu.vector_store %arg14[%c0_36, %c0_37], %95 {strides = array<i32>} : memref<8x32xf32, #tpu.memory_space<vmem>>, vector<8x32xf32>,
    %c0_i32_38 = arith.constant 0 : i32
    %97 = arith.cmpi eq, %arg2, %c0_i32_38 : i32
    %98 = arith.extui %97 : i1 to i32
    %c0_i32_39 = arith.constant 0 : i32
    %99 = arith.cmpi ne, %98, %c0_i32_39 : i32
    scf.if %99 {
      %c0_40 = arith.constant 0 : index
      %c0_41 = arith.constant 0 : index
      %100 = vector.load %arg14[%c0_40, %c0_41] : memref<8x32xf32, #tpu.memory_space<vmem>>, vector<8x32xf32>
      %c0_42 = arith.constant 0 : index
      %c0_43 = arith.constant 0 : index
      %c0_44 = arith.constant 0 : index
      %101 = vector.load %arg11[%c0_42, %c0_43, %c0_44] : memref<1x8x32xf32, #tpu.memory_space<vmem>>, vector<1x8x32xf32>
      %102 = vector.shape_cast %101 : vector<1x8x32xf32> to vector<8x32xf32>
      %103 = vector.shape_cast %100 : vector<8x32xf32> to vector<1x8x32xf32>
      tpu.vector_store %arg11[%c0_42, %c0_43, %c0_44], %103 {strides = array<i32>} : memref<1x8x32xf32, #tpu.memory_space<vmem>>, vector<1x8x32xf32>,
    } else {
    }
    return
  }
  func.func @transform_0(%arg0: i32, %arg1: i32, %arg2: i32) -> (i32, i32, i32) {
    %c0_i32 = arith.constant 0 : i32
    %c0_i32_0 = arith.constant 0 : i32
    %c0_i32_1 = arith.constant 0 : i32
    return %arg0, %c0_i32, %c0_i32_0 : i32, i32, i32
  }
  func.func @transform_1(%arg0: i32, %arg1: i32, %arg2: i32) -> (i32, i32, i32) {
    %c0_i32 = arith.constant 0 : i32
    %c0_i32_0 = arith.constant 0 : i32
    %c0_i32_1 = arith.constant 0 : i32
    return %arg2, %c0_i32, %c0_i32_0 : i32, i32, i32
  }
  func.func @transform_2(%arg0: i32, %arg1: i32, %arg2: i32) -> (i32, i32, i32) {
    %c0_i32 = arith.constant 0 : i32
    %c0_i32_0 = arith.constant 0 : i32
    %c0_i32_1 = arith.constant 0 : i32
    return %arg2, %c0_i32, %c0_i32_0 : i32, i32, i32
  }
  func.func @transform_3(%arg0: i32, %arg1: i32, %arg2: i32) -> (i32, i32, i32) {
    %c0_i32 = arith.constant 0 : i32
    %c0_i32_0 = arith.constant 0 : i32
    %c0_i32_1 = arith.constant 0 : i32
    return %arg2, %c0_i32, %c0_i32_0 : i32, i32, i32
  }
  func.func @transform_4(%arg0: i32, %arg1: i32, %arg2: i32) -> (i32, i32, i32) {
    %c0_i32 = arith.constant 0 : i32
    %c0_i32_0 = arith.constant 0 : i32
    %c0_i32_1 = arith.constant 0 : i32
    return %arg2, %c0_i32, %c0_i32_0 : i32, i32, i32
  }
  func.func @transform_5(%arg0: i32, %arg1: i32, %arg2: i32) -> (i32, i32, i32) {
    %c0_i32 = arith.constant 0 : i32
    %c0_i32_0 = arith.constant 0 : i32
    %c0_i32_1 = arith.constant 0 : i32
    return %arg2, %c0_i32, %c0_i32_0 : i32, i32, i32
  }
  func.func @transform_6(%arg0: i32, %arg1: i32, %arg2: i32) -> (i32, i32, i32) {
    %c0_i32 = arith.constant 0 : i32
    %c0_i32_0 = arith.constant 0 : i32
    %c0_i32_1 = arith.constant 0 : i32
    return %arg2, %c0_i32, %c0_i32_0 : i32, i32, i32
  }
  func.func @transform_7(%arg0: i32, %arg1: i32, %arg2: i32) -> (i32, i32, i32) {
    %c0_i32 = arith.constant 0 : i32
    %c0_i32_0 = arith.constant 0 : i32
    %c0_i32_1 = arith.constant 0 : i32
    return %arg2, %c0_i32, %c0_i32_0 : i32, i32, i32
  }
  func.func @transform_8(%arg0: i32, %arg1: i32, %arg2: i32) -> (i32, i32, i32) {
    %c0_i32 = arith.constant 0 : i32
    %c0_i32_0 = arith.constant 0 : i32
    return %arg0, %arg1, %c0_i32 : i32, i32, i32
  }
}

</mosaic_0001>

<llo_original>
// kernel: tpu_custom_call.1
$region0: #{tpu_custom_call.1}
  #allocation0 [shape = 'u32[]', space=smem, size = 0x4, offset = 0x4, fixed_abs, tag = 'smem constant byte address 0x4 - core index']
  #allocation1 [shape = 'u32[144,128]{1,0:T(1,128)}', space=vmem, size = 0x12000, scoped, tag = 'internal scratch']
  #allocation2 [shape = 'bf16[1,8,32]{2,1,0:T(8,128)(2,1)}', space=vmem, size = 0x800, scoped, tag = 'scratch operand']
  #allocation3 [shape = 'bf16[1,8,32]{2,1,0:T(8,128)(2,1)}', space=vmem, size = 0x800, scoped, tag = 'scratch operand']
  #allocation4 [shape = 'f32[8,32]{1,0:T(8,128)}', space=vmem, size = 0x1000, scoped, tag = 'scratch operand']
  %s0 = inlined_call_operand.hbm [shape: bf16[2,8,32], index: 0, kind: input, shape index: {}]
  %s1 = inlined_call_operand.hbm [shape: bf16[1,32,32], index: 1, kind: input, shape index: {}]
  %s2 = inlined_call_operand.hbm [shape: bf16[1,32,32], index: 2, kind: input, shape index: {}]
  %s3 = inlined_call_operand.hbm [shape: bf16[1,32,32], index: 3, kind: input, shape index: {}]
  %s4 = inlined_call_operand.hbm [shape: f32[1,1,32], index: 4, kind: input, shape index: {}]
  %s5 = inlined_call_operand.hbm [shape: f32[1,1,32], index: 5, kind: input, shape index: {}]
  %s6 = inlined_call_operand.hbm [shape: f32[1,1,32], index: 6, kind: input, shape index: {}]
  %s7 = inlined_call_operand.hbm [shape: bf16[1,32,32], index: 7, kind: input, shape index: {}]
  %s8 = inlined_call_operand.hbm [shape: f32[2,8,32], index: 8, kind: output, shape index: {}]
  %s9 = sld [smem:[#allocation0]]
  $region109: #{tpu_custom_call.1} parent=0
    _
  %s11 = ssub.s32 1, %s9
  %s12 = scalar_select 0, %s11, %s9
  $region1: #{tpu_custom_call.1} parent=0
    #allocation5 [shape = 'u8[4096]{0}', space=vmem, size = 0x1000, scoped, tag = 'input window, operand 0']
    #allocation6 [shape = 's32[2]{0}', space=sflag, size = 0x8, scoped, tag = 'scoped memory for tpu_custom_call.1']
    #allocation7 [shape = 's32[2]{0}', space=sflag, size = 0x8, scoped, tag = 'scoped memory for tpu_custom_call.1']
    #allocation8 [shape = 'u8[8192]{0}', space=vmem, size = 0x2000, scoped, tag = 'input window, operand 1, single buffered']
    #allocation9 [shape = 's32[1]{0}', space=sflag, size = 0x4, scoped, tag = 'scoped memory for tpu_custom_call.1']
    #allocation10 [shape = 'u8[8192]{0}', space=vmem, size = 0x2000, scoped, tag = 'input window, operand 2, single buffered']
    #allocation11 [shape = 'u8[8192]{0}', space=vmem, size = 0x2000, scoped, tag = 'input window, operand 3, single buffered']
    #allocation12 [shape = 's32[1]{0}', space=sflag, size = 0x4, scoped, tag = 'scoped memory for tpu_custom_call.1']
    #allocation13 [shape = 'u8[512]{0}', space=vmem, size = 0x400, scoped, tag = 'input window, operand 4, single buffered']
    #allocation14 [shape = 'u8[512]{0}', space=vmem, size = 0x400, scoped, tag = 'input window, operand 5, single buffered']
    #allocation15 [shape = 's32[1]{0}', space=sflag, size = 0x4, scoped, tag = 'scoped memory for tpu_custom_call.1']
    #allocation16 [shape = 'u8[512]{0}', space=vmem, size = 0x400, scoped, tag = 'input window, operand 6, single buffered']
    #allocation17 [shape = 'u8[8192]{0}', space=vmem, size = 0x2000, scoped, tag = 'input window, operand 7, single buffered']
    #allocation18 [shape = 's32[1]{0}', space=sflag, size = 0x4, scoped, tag = 'scoped memory for tpu_custom_call.1']
    #allocation19 [shape = 'u8[8192]{0}', space=vmem, size = 0x2000, scoped, tag = 'output window, operand 0']
    %13 = vsyncpa [#allocation6], 0
    %s14 = scalar_lea.sflag [#allocation6], 1
    %15 = vsyncpa %s14, 0
    %16 = vsyncpa [#allocation9], 0
    %17 = vsyncpa [#allocation12], 0
    %18 = vsyncpa [#allocation15], 0
    %19 = vsyncpa [#allocation18], 0
    %20 = vsyncpa [#allocation7], 0
    %s21 = scalar_lea.sflag [#allocation7], 1
    %22 = vsyncpa %s21, 0
    loop: start=0, step=1, limit=4
    $region2: #{tpu_custom_call.1} parent=1 // loop_pre_header
      _
    $region3: #{tpu_custom_call.1} parent=1 // loop_header
      %s24 = sphi 0, %s28
      %p25 = scmp.ge.s32.totalorder %s24, 4
      %s31 = sphi 0, %s50
      %s32 = sphi 0, %s46
      %s33 = sphi 0, %s42
      %s34 = sphi 0, %s31
      %s35 = sphi 0, %s32
      %s36 = sphi 0, %s33
      %s37 = sphi 0, %s34
      %s38 = sphi 0, %s35
      %s39 = sphi 0, %s36
      %s53 = sphi 0, %s55
      %s56 = sphi 0, %s53
      %s57 = sphi 0, %s56
      %s73 = sphi 0, %s57
      %s79 = sphi 0, %s81
      %s82 = sphi 0, %s79
      %s83 = sphi 0, %s82
      %s99 = sphi 0, %s83
      %s105 = sphi 0, %s107
      %s108 = sphi 0, %s105
      %s109 = sphi 0, %s108
      %s125 = sphi 0, %s109
      %s131 = sphi 0, %s133
      %s134 = sphi 0, %s131
      %s135 = sphi 0, %s134
      %s151 = sphi 0, %s135
      %s157 = sphi 0, %s159
      %s160 = sphi 0, %s157
      %s161 = sphi 0, %s160
      %s177 = sphi 0, %s161
      %s183 = sphi 0, %s185
      %s186 = sphi 0, %s183
      %s187 = sphi 0, %s186
      %s203 = sphi 0, %s187
      %s209 = sphi 0, %s211
      %s212 = sphi 0, %s209
      %s213 = sphi 0, %s212
      %s229 = sphi 0, %s213
      %s235 = sphi 0, %s237
      %s238 = sphi 0, %s235
      %s239 = sphi 0, %s238
      %s255 = sphi 0, %s239
      %s263 = sphi 0, %s265
      %s266 = sphi 0, %s263
      %s267 = sphi 0, %s266
      %s283 = sphi 0, %s267
    $region4: #{tpu_custom_call.1} parent=1 // loop_header_branch
      %27 = sbr.rel (%p25) target = $region8
    $region5: #{tpu_custom_call.1} parent=1 // loop_body
      %s29 = ssub.s32 %s24, 1
      %s30 = ssub.s32 %s24, 2
      %s40 = sadd.s32 1, %s33
      %p41 = scmp.ge.s32.totalorder %s40, 1
      %s42 = scalar_select %p41, 0, %s40
      %s43 = sadd.s32 1, %s32
      %s44 = scalar_select %p41, %s43, %s32
      %p45 = scmp.ge.s32.totalorder %s44, 1
      %s46 = scalar_select %p45, 0, %s44
      %s47 = sadd.s32 1, %s31
      %s48 = scalar_select %p45, %s47, %s31
      %p49 = scmp.ge.s32.totalorder %s48, 2
      %s50 = scalar_select %p49, 0, %s48
      %s51 = ssub.s32 %s31, %s50
      %p52 = scmp.eq.s32.totalorder %s51, 0
      %s54 = sadd.s32 %s53, 1
      %s55 = scalar_select %p52, %s53, %s54
      %p58 = pneg %p52
      %p59 = scmp.eq.s32.totalorder %s24, 1
      %p60 = por %p58, %p59
      %p61 = scmp.ne.s32.totalorder %s53, %s56
      %p62 = scmp.eq.s32.totalorder %s24, 0
      %p63 = por %p61, %p62
      %p64 = scmp.ne.s32.totalorder %s53, %s56
      %p65 = scmp.eq.s32.totalorder %s29, 1
      %p66 = por %p64, %p65
      %p67 = scmp.ne.s32.totalorder %s56, %s57
      %p68 = scmp.eq.s32.totalorder %s29, 0
      %p69 = por %p67, %p68
      %p70 = scmp.ne.s32.totalorder %s56, %s57
      %p71 = scmp.eq.s32.totalorder %s30, 1
      %p72 = por %p70, %p71
      %p74 = scmp.ne.s32.totalorder %s57, %s73
      %p75 = scmp.eq.s32.totalorder %s30, 0
      %p76 = por %p74, %p75
      %s77 = ssub.s32 %s33, %s42
      %p78 = scmp.eq.s32.totalorder %s77, 0
      %s80 = sadd.s32 %s79, 1
      %s81 = scalar_select %p78, %s79, %s80
      %p84 = pneg %p78
      %p85 = scmp.eq.s32.totalorder %s24, 1
      %p86 = por %p84, %p85
      %p87 = scmp.ne.s32.totalorder %s79, %s82
      %p88 = scmp.eq.s32.totalorder %s24, 0
      %p89 = por %p87, %p88
      %p90 = scmp.ne.s32.totalorder %s79, %s82
      %p91 = scmp.eq.s32.totalorder %s29, 1
      %p92 = por %p90, %p91
      %p93 = scmp.ne.s32.totalorder %s82, %s83
      %p94 = scmp.eq.s32.totalorder %s29, 0
      %p95 = por %p93, %p94
      %p96 = scmp.ne.s32.totalorder %s82, %s83
      %p97 = scmp.eq.s32.totalorder %s30, 1
      %p98 = por %p96, %p97
      %p100 = scmp.ne.s32.totalorder %s83, %s99
      %p101 = scmp.eq.s32.totalorder %s30, 0
      %p102 = por %p100, %p101
      %s103 = ssub.s32 %s33, %s42
      %p104 = scmp.eq.s32.totalorder %s103, 0
      %s106 = sadd.s32 %s105, 1
      %s107 = scalar_select %p104, %s105, %s106
      %p110 = pneg %p104
      %p111 = scmp.eq.s32.totalorder %s24, 1
      %p112 = por %p110, %p111
      %p113 = scmp.ne.s32.totalorder %s105, %s108
      %p114 = scmp.eq.s32.totalorder %s24, 0
      %p115 = por %p113, %p114
      %p116 = scmp.ne.s32.totalorder %s105, %s108
      %p117 = scmp.eq.s32.totalorder %s29, 1
      %p118 = por %p116, %p117
      %p119 = scmp.ne.s32.totalorder %s108, %s109
      %p120 = scmp.eq.s32.totalorder %s29, 0
      %p121 = por %p119, %p120
      %p122 = scmp.ne.s32.totalorder %s108, %s109
      %p123 = scmp.eq.s32.totalorder %s30, 1
      %p124 = por %p122, %p123
      %p126 = scmp.ne.s32.totalorder %s109, %s125
      %p127 = scmp.eq.s32.totalorder %s30, 0
      %p128 = por %p126, %p127
      %s129 = ssub.s32 %s33, %s42
      %p130 = scmp.eq.s32.totalorder %s129, 0
      %s132 = sadd.s32 %s131, 1
      %s133 = scalar_select %p130, %s131, %s132
      %p136 = pneg %p130
      %p137 = scmp.eq.s32.totalorder %s24, 1
      %p138 = por %p136, %p137
      %p139 = scmp.ne.s32.totalorder %s131, %s134
      %p140 = scmp.eq.s32.totalorder %s24, 0
      %p141 = por %p139, %p140
      %p142 = scmp.ne.s32.totalorder %s131, %s134
      %p143 = scmp.eq.s32.totalorder %s29, 1
      %p144 = por %p142, %p143
      %p145 = scmp.ne.s32.totalorder %s134, %s135
      %p146 = scmp.eq.s32.totalorder %s29, 0
      %p147 = por %p145, %p146
      %p148 = scmp.ne.s32.totalorder %s134, %s135
      %p149 = scmp.eq.s32.totalorder %s30, 1
      %p150 = por %p148, %p149
      %p152 = scmp.ne.s32.totalorder %s135, %s151
      %p153 = scmp.eq.s32.totalorder %s30, 0
      %p154 = por %p152, %p153
      %s155 = ssub.s32 %s33, %s42
      %p156 = scmp.eq.s32.totalorder %s155, 0
      %s158 = sadd.s32 %s157, 1
      %s159 = scalar_select %p156, %s157, %s158
      %p162 = pneg %p156
      %p163 = scmp.eq.s32.totalorder %s24, 1
      %p164 = por %p162, %p163
      %p165 = scmp.ne.s32.totalorder %s157, %s160
      %p166 = scmp.eq.s32.totalorder %s24, 0
      %p167 = por %p165, %p166
      %p168 = scmp.ne.s32.totalorder %s157, %s160
      %p169 = scmp.eq.s32.totalorder %s29, 1
      %p170 = por %p168, %p169
      %p171 = scmp.ne.s32.totalorder %s160, %s161
      %p172 = scmp.eq.s32.totalorder %s29, 0
      %p173 = por %p171, %p172
      %p174 = scmp.ne.s32.totalorder %s160, %s161
      %p175 = scmp.eq.s32.totalorder %s30, 1
      %p176 = por %p174, %p175
      %p178 = scmp.ne.s32.totalorder %s161, %s177
      %p179 = scmp.eq.s32.totalorder %s30, 0
      %p180 = por %p178, %p179
      %s181 = ssub.s32 %s33, %s42
      %p182 = scmp.eq.s32.totalorder %s181, 0
      %s184 = sadd.s32 %s183, 1
      %s185 = scalar_select %p182, %s183, %s184
      %p188 = pneg %p182
      %p189 = scmp.eq.s32.totalorder %s24, 1
      %p190 = por %p188, %p189
      %p191 = scmp.ne.s32.totalorder %s183, %s186
      %p192 = scmp.eq.s32.totalorder %s24, 0
      %p193 = por %p191, %p192
      %p194 = scmp.ne.s32.totalorder %s183, %s186
      %p195 = scmp.eq.s32.totalorder %s29, 1
      %p196 = por %p194, %p195
      %p197 = scmp.ne.s32.totalorder %s186, %s187
      %p198 = scmp.eq.s32.totalorder %s29, 0
      %p199 = por %p197, %p198
      %p200 = scmp.ne.s32.totalorder %s186, %s187
      %p201 = scmp.eq.s32.totalorder %s30, 1
      %p202 = por %p200, %p201
      %p204 = scmp.ne.s32.totalorder %s187, %s203
      %p205 = scmp.eq.s32.totalorder %s30, 0
      %p206 = por %p204, %p205
      %s207 = ssub.s32 %s33, %s42
      %p208 = scmp.eq.s32.totalorder %s207, 0
      %s210 = sadd.s32 %s209, 1
      %s211 = scalar_select %p208, %s209, %s210
      %p214 = pneg %p208
      %p215 = scmp.eq.s32.totalorder %s24, 1
      %p216 = por %p214, %p215
      %p217 = scmp.ne.s32.totalorder %s209, %s212
      %p218 = scmp.eq.s32.totalorder %s24, 0
      %p219 = por %p217, %p218
      %p220 = scmp.ne.s32.totalorder %s209, %s212
      %p221 = scmp.eq.s32.totalorder %s29, 1
      %p222 = por %p220, %p221
      %p223 = scmp.ne.s32.totalorder %s212, %s213
      %p224 = scmp.eq.s32.totalorder %s29, 0
      %p225 = por %p223, %p224
      %p226 = scmp.ne.s32.totalorder %s212, %s213
      %p227 = scmp.eq.s32.totalorder %s30, 1
      %p228 = por %p226, %p227
      %p230 = scmp.ne.s32.totalorder %s213, %s229
      %p231 = scmp.eq.s32.totalorder %s30, 0
      %p232 = por %p230, %p231
      %s233 = ssub.s32 %s33, %s42
      %p234 = scmp.eq.s32.totalorder %s233, 0
      %s236 = sadd.s32 %s235, 1
      %s237 = scalar_select %p234, %s235, %s236
      %p240 = pneg %p234
      %p241 = scmp.eq.s32.totalorder %s24, 1
      %p242 = por %p240, %p241
      %p243 = scmp.ne.s32.totalorder %s235, %s238
      %p244 = scmp.eq.s32.totalorder %s24, 0
      %p245 = por %p243, %p244
      %p246 = scmp.ne.s32.totalorder %s235, %s238
      %p247 = scmp.eq.s32.totalorder %s29, 1
      %p248 = por %p246, %p247
      %p249 = scmp.ne.s32.totalorder %s238, %s239
      %p250 = scmp.eq.s32.totalorder %s29, 0
      %p251 = por %p249, %p250
      %p252 = scmp.ne.s32.totalorder %s238, %s239
      %p253 = scmp.eq.s32.totalorder %s30, 1
      %p254 = por %p252, %p253
      %p256 = scmp.ne.s32.totalorder %s239, %s255
      %p257 = scmp.eq.s32.totalorder %s30, 0
      %p258 = por %p256, %p257
      %s259 = ssub.s32 %s31, %s50
      %s260 = ssub.s32 %s32, %s46
      %s261 = sor.u32 %s259, %s260
      %p262 = scmp.eq.s32.totalorder %s261, 0
      %s264 = sadd.s32 %s263, 1
      %s265 = scalar_select %p262, %s263, %s264
      %p268 = pneg %p262
      %p269 = scmp.eq.s32.totalorder %s24, 1
      %p270 = por %p268, %p269
      %p271 = scmp.ne.s32.totalorder %s263, %s266
      %p272 = scmp.eq.s32.totalorder %s24, 0
      %p273 = por %p271, %p272
      %p274 = scmp.ne.s32.totalorder %s263, %s266
      %p275 = scmp.eq.s32.totalorder %s29, 1
      %p276 = por %p274, %p275
      %p277 = scmp.ne.s32.totalorder %s266, %s267
      %p278 = scmp.eq.s32.totalorder %s29, 0
      %p279 = por %p277, %p278
      %p280 = scmp.ne.s32.totalorder %s266, %s267
      %p281 = scmp.eq.s32.totalorder %s30, 1
      %p282 = por %p280, %p281
      %p284 = scmp.ne.s32.totalorder %s267, %s283
      %p285 = scmp.eq.s32.totalorder %s30, 0
      %p286 = por %p284, %p285
      %p287 = scmp.le.s32.totalorder 1, %s24
      %p288 = scmp.lt.s32.totalorder %s24, 3
      %p289 = pnand %p287, %p288
      %p290 = pneg %p289
      // Predicated region
      $region9: #{tpu_custom_call.1} parent=5 // pred_check
        _
      $region10: #{tpu_custom_call.1} parent=5 // pred_check_branch
        %292 = sbr.rel (%p289) target = $region12
      $region11: #{tpu_custom_call.1} parent=5 // pred_region
        %s293 = ssub.s32 %s24, 1
        // Predicated region
        $region13: #{tpu_custom_call.1} parent=11 // pred_check
          %p294 = pneg %p95
        $region14: #{tpu_custom_call.1} parent=11 // pred_check_branch
          %296 = sbr.rel (%p294) target = $region16
        $region15: #{tpu_custom_call.1} parent=11 // pred_region
          %s298 = ssub.s32 256, 256
          %299 = vsyncadd [#allocation9], %s298
          %s300 = smul.addr %s36, 4
          %s301 = smul.addr %s300, 64
          %s302 = scalar_lea.hbm %s1, %s301
          %s303 = sshll.u32 [#allocation8], 4
          %s304 = int_to_ptr.vmem [resolvable:$true] %s303
          %309 = dma.hbm_to_vmem [thread:$0]  %s302, 256, %s304, [#allocation9], 64, 64, 4
        $region16: #{tpu_custom_call.1} parent=11 // pred_fallthru
          _
        // Predicated region
        $region17: #{tpu_custom_call.1} parent=11 // pred_check
          %p310 = pneg %p121
        $region18: #{tpu_custom_call.1} parent=11 // pred_check_branch
          %312 = sbr.rel (%p310) target = $region20
        $region19: #{tpu_custom_call.1} parent=11 // pred_region
          %s314 = ssub.s32 256, 256
          %315 = vsyncadd [#allocation9], %s314
          %s316 = smul.addr %s36, 4
          %s317 = smul.addr %s316, 64
          %s318 = scalar_lea.hbm %s2, %s317
          %s319 = sshll.u32 [#allocation10], 4
          %s320 = int_to_ptr.vmem [resolvable:$true] %s319
          %325 = dma.hbm_to_vmem [thread:$0]  %s318, 256, %s320, [#allocation9], 64, 64, 4
        $region20: #{tpu_custom_call.1} parent=11 // pred_fallthru
          _
        // Predicated region
        $region21: #{tpu_custom_call.1} parent=11 // pred_check
          %p326 = pneg %p147
        $region22: #{tpu_custom_call.1} parent=11 // pred_check_branch
          %328 = sbr.rel (%p326) target = $region24
        $region23: #{tpu_custom_call.1} parent=11 // pred_region
          %s330 = ssub.s32 256, 256
          %331 = vsyncadd [#allocation12], %s330
          %s332 = smul.addr %s36, 4
          %s333 = smul.addr %s332, 64
          %s334 = scalar_lea.hbm %s3, %s333
          %s335 = sshll.u32 [#allocation11], 4
          %s336 = int_to_ptr.vmem [resolvable:$true] %s335
          %341 = dma.hbm_to_vmem [thread:$0]  %s334, 256, %s336, [#allocation12], 64, 64, 4
        $region24: #{tpu_custom_call.1} parent=11 // pred_fallthru
          _
        // Predicated region
        $region25: #{tpu_custom_call.1} parent=11 // pred_check
          %p342 = pneg %p173
        $region26: #{tpu_custom_call.1} parent=11 // pred_check_branch
          %344 = sbr.rel (%p342) target = $region28
        $region27: #{tpu_custom_call.1} parent=11 // pred_region
          %s346 = ssub.s32 16, 16
          %347 = vsyncadd [#allocation12], %s346
          %s348 = smul.addr %s36, 16
          %s349 = scalar_lea.hbm %s4, %s348
          %s351 = sshll.u32 [#allocation13], 4
          %s352 = int_to_ptr.vmem [resolvable:$true] %s351
          %354 = dma.hbm_to_vmem [thread:$0]  %s349, 16, %s352, [#allocation12]
        $region28: #{tpu_custom_call.1} parent=11 // pred_fallthru
          _
        // Predicated region
        $region29: #{tpu_custom_call.1} parent=11 // pred_check
          %p355 = pneg %p199
        $region30: #{tpu_custom_call.1} parent=11 // pred_check_branch
          %357 = sbr.rel (%p355) target = $region32
        $region31: #{tpu_custom_call.1} parent=11 // pred_region
          %s359 = ssub.s32 16, 16
          %360 = vsyncadd [#allocation15], %s359
          %s361 = smul.addr %s36, 16
          %s362 = scalar_lea.hbm %s5, %s361
          %s364 = sshll.u32 [#allocation14], 4
          %s365 = int_to_ptr.vmem [resolvable:$true] %s364
          %367 = dma.hbm_to_vmem [thread:$0]  %s362, 16, %s365, [#allocation15]
        $region32: #{tpu_custom_call.1} parent=11 // pred_fallthru
          _
        // Predicated region
        $region33: #{tpu_custom_call.1} parent=11 // pred_check
          %p368 = pneg %p225
        $region34: #{tpu_custom_call.1} parent=11 // pred_check_branch
          %370 = sbr.rel (%p368) target = $region36
        $region35: #{tpu_custom_call.1} parent=11 // pred_region
          %s372 = ssub.s32 16, 16
          %373 = vsyncadd [#allocation15], %s372
          %s374 = smul.addr %s36, 16
          %s375 = scalar_lea.hbm %s6, %s374
          %s377 = sshll.u32 [#allocation16], 4
          %s378 = int_to_ptr.vmem [resolvable:$true] %s377
          %380 = dma.hbm_to_vmem [thread:$0]  %s375, 16, %s378, [#allocation15]
        $region36: #{tpu_custom_call.1} parent=11 // pred_fallthru
          _
        // Predicated region
        $region37: #{tpu_custom_call.1} parent=11 // pred_check
          %p381 = pneg %p251
        $region38: #{tpu_custom_call.1} parent=11 // pred_check_branch
          %383 = sbr.rel (%p381) target = $region40
        $region39: #{tpu_custom_call.1} parent=11 // pred_region
          %s385 = ssub.s32 256, 256
          %386 = vsyncadd [#allocation18], %s385
          %s387 = smul.addr %s36, 4
          %s388 = smul.addr %s387, 64
          %s389 = scalar_lea.hbm %s7, %s388
          %s390 = sshll.u32 [#allocation17], 4
          %s391 = int_to_ptr.vmem [resolvable:$true] %s390
          %396 = dma.hbm_to_vmem [thread:$0]  %s389, 256, %s391, [#allocation18], 64, 64, 4
        $region40: #{tpu_custom_call.1} parent=11 // pred_fallthru
          _
      $region12: #{tpu_custom_call.1} parent=5 // pred_fallthru
        _
      %p397 = scmp.lt.s32.totalorder %s24, 2
      // Predicated region
      $region41: #{tpu_custom_call.1} parent=5 // pred_check
        %p398 = pneg %p397
      $region42: #{tpu_custom_call.1} parent=5 // pred_check_branch
        %400 = sbr.rel (%p398) target = $region44
      $region43: #{tpu_custom_call.1} parent=5 // pred_region
        // Predicated region
        $region45: #{tpu_custom_call.1} parent=43 // pred_check
          %p401 = pneg %p63
        $region46: #{tpu_custom_call.1} parent=43 // pred_check_branch
          %403 = sbr.rel (%p401) target = $region48
        $region47: #{tpu_custom_call.1} parent=43 // pred_region
          %s404 = sand.u32 %s53, 1
          %s405 = scalar_lea.sflag [#allocation6], %s404
          %s406 = sand.u32 %s53, 1
          %s407 = smul.addr %s406, 4
          %s408 = scalar_lea.vmem [#allocation5], %s407
          %s410 = ssub.s32 64, 64
          %411 = vsyncadd %s405, %s410
          %s412 = smul.addr %s31, 64
          %s413 = scalar_lea.hbm %s0, %s412
          %s415 = sshll.u32 %s408, 4
          %s416 = int_to_ptr.vmem [resolvable:$true] %s415
          %418 = dma.hbm_to_vmem [thread:$0]  %s413, 64, %s416, %s405
        $region48: #{tpu_custom_call.1} parent=43 // pred_fallthru
          _
      $region44: #{tpu_custom_call.1} parent=5 // pred_fallthru
        _
      %p419 = scmp.le.s32.totalorder 1, %s24
      %p420 = scmp.lt.s32.totalorder %s24, 3
      %p421 = pnand %p419, %p420
      %p422 = pneg %p421
      // Predicated region
      $region49: #{tpu_custom_call.1} parent=5 // pred_check
        _
      $region50: #{tpu_custom_call.1} parent=5 // pred_check_branch
        %424 = sbr.rel (%p421) target = $region52
      $region51: #{tpu_custom_call.1} parent=5 // pred_region
        %s425 = ssub.s32 %s24, 1
        %s426 = sand.u32 %s56, 1
        %s427 = scalar_lea.sflag [#allocation6], %s426
        %s428 = sand.u32 %s56, 1
        %s429 = smul.addr %s428, 4
        %s430 = scalar_lea.vmem [#allocation5], %s429
        // Predicated region
        $region53: #{tpu_custom_call.1} parent=51 // pred_check
          %p431 = pneg %p69
        $region54: #{tpu_custom_call.1} parent=51 // pred_check_branch
          %433 = sbr.rel (%p431) target = $region56
        $region55: #{tpu_custom_call.1} parent=51 // pred_region
          %434 = dma.done %s427, 64
        $region56: #{tpu_custom_call.1} parent=51 // pred_fallthru
          _
        // Predicated region
        $region57: #{tpu_custom_call.1} parent=51 // pred_check
          %p435 = pneg %p95
        $region58: #{tpu_custom_call.1} parent=51 // pred_check_branch
          %437 = sbr.rel (%p435) target = $region60
        $region59: #{tpu_custom_call.1} parent=51 // pred_region
          %438 = dma.done [#allocation9], 256
        $region60: #{tpu_custom_call.1} parent=51 // pred_fallthru
          _
        // Predicated region
        $region61: #{tpu_custom_call.1} parent=51 // pred_check
          %p439 = pneg %p121
        $region62: #{tpu_custom_call.1} parent=51 // pred_check_branch
          %441 = sbr.rel (%p439) target = $region64
        $region63: #{tpu_custom_call.1} parent=51 // pred_region
          %442 = dma.done [#allocation9], 256
        $region64: #{tpu_custom_call.1} parent=51 // pred_fallthru
          _
        // Predicated region
        $region65: #{tpu_custom_call.1} parent=51 // pred_check
          %p443 = pneg %p147
        $region66: #{tpu_custom_call.1} parent=51 // pred_check_branch
          %445 = sbr.rel (%p443) target = $region68
        $region67: #{tpu_custom_call.1} parent=51 // pred_region
          %446 = dma.done [#allocation12], 256
        $region68: #{tpu_custom_call.1} parent=51 // pred_fallthru
          _
        // Predicated region
        $region69: #{tpu_custom_call.1} parent=51 // pred_check
          %p447 = pneg %p173
        $region70: #{tpu_custom_call.1} parent=51 // pred_check_branch
          %449 = sbr.rel (%p447) target = $region72
        $region71: #{tpu_custom_call.1} parent=51 // pred_region
          %450 = dma.done [#allocation12], 16
        $region72: #{tpu_custom_call.1} parent=51 // pred_fallthru
          _
        // Predicated region
        $region73: #{tpu_custom_call.1} parent=51 // pred_check
          %p451 = pneg %p199
        $region74: #{tpu_custom_call.1} parent=51 // pred_check_branch
          %453 = sbr.rel (%p451) target = $region76
        $region75: #{tpu_custom_call.1} parent=51 // pred_region
          %454 = dma.done [#allocation15], 16
        $region76: #{tpu_custom_call.1} parent=51 // pred_fallthru
          _
        // Predicated region
        $region77: #{tpu_custom_call.1} parent=51 // pred_check
          %p455 = pneg %p225
        $region78: #{tpu_custom_call.1} parent=51 // pred_check_branch
          %457 = sbr.rel (%p455) target = $region80
        $region79: #{tpu_custom_call.1} parent=51 // pred_region
          %458 = dma.done [#allocation15], 16
        $region80: #{tpu_custom_call.1} parent=51 // pred_fallthru
          _
        // Predicated region
        $region81: #{tpu_custom_call.1} parent=51 // pred_check
          %p459 = pneg %p251
        $region82: #{tpu_custom_call.1} parent=51 // pred_check_branch
          %461 = sbr.rel (%p459) target = $region84
        $region83: #{tpu_custom_call.1} parent=51 // pred_region
          %462 = dma.done [#allocation18], 256
        $region84: #{tpu_custom_call.1} parent=51 // pred_fallthru
          _
        %s463 = sand.u32 %s56, 1
        %s464 = scalar_lea.sflag [#allocation6], %s463
        %s465 = sand.u32 %s56, 1
        %s466 = smul.addr %s465, 4
        %s467 = scalar_lea.vmem [#allocation5], %s466
        %p468 = pneg %p69
        %p469 = pneg %p66
        %p470 = pneg %p95
        %p471 = pneg %p92
        %p472 = pneg %p121
        %p473 = pneg %p118
        %p474 = pneg %p147
        %p475 = pneg %p144
        %p476 = pneg %p173
        %p477 = pneg %p170
        %p478 = pneg %p199
        %p479 = pneg %p196
        %p480 = pneg %p225
        %p481 = pneg %p222
        %p482 = pneg %p251
        %p483 = pneg %p248
        %p484 = pneg %p279
        %p485 = pneg %p276
        %s486 = sand.u32 %s266, 1
        %s487 = scalar_lea.sflag [#allocation7], %s486
        %s488 = sand.u32 %s266, 1
        %s489 = smul.addr %s488, 8
        %s490 = scalar_lea.vmem [#allocation19], %s489
        %p492 = scmp.eq.s32.totalorder %s35, 0
        // Predicated region
        $region85: #{tpu_custom_call.1} parent=51 // pred_check
          %p493 = pneg %p492
        $region86: #{tpu_custom_call.1} parent=51 // pred_check_branch
          %495 = sbr.rel (%p493) target = $region88
        $region87: #{tpu_custom_call.1} parent=51 // pred_region
          %v496 = vld [vmem:[%s430] sm:$0xf]
          %v497 = vld [vmem:[#allocation10] sm:$0xf]
          %v498 = vld [vmem:[#allocation10 + $0x4] sm:$0xf]
          %v499 = vld [vmem:[#allocation10 + $0x8] sm:$0xf]
          %v500 = vld [vmem:[#allocation10 + $0xc] sm:$0xf]
          %v501 = vld [vmem:[#allocation14] sm:$0x1]
          %v503 = vlaneseq
          %v504 = vshrl.u32 %v503, 7
          %v505 = vsub.s32 0, %v504
          %v506 = vrot.slane %v501, %v505
          %v512 = vunpack.c.l.b16 %v497
          %v513 = vunpack.c.l.b16 %v498
          %v514 = vunpack.c.l.b16 %v499
          %v515 = vunpack.c.l.b16 %v500
          %v516 = vpack.c.b16 %v513, %v512
          %v517 = vpack.c.b16 %v515, %v514
          %vm520 = vcmask 261120
          %v522 = vsel %vm520, %v496, 0
          %524 = vmatprep.subr.bf16.mxu0 0
          %525 = vmatpush1.bf16.msra.mxu0 %v516
          %526 = vmatprep.subr.bf16.mxu0 0
          %527 = vmatpush1.bf16.msra.mxu0 %v517
          %528 = vmatprep.subr.bf16.mxu0 0
          %529 = vmatpush1.bf16.msra.mxu0 0
          %530 = vmatprep.subr.bf16.mxu0 0
          %531 = vmatpush1.bf16.msra.mxu0 0
          %532 = vmatprep.subr.bf16.mxu0 0
          %533 = vmatpush1.bf16.msra.mxu0 0
          %534 = vmatprep.subr.bf16.mxu0 0
          %535 = vmatpush1.bf16.msra.mxu0 0
          %536 = vmatprep.subr.bf16.mxu0 0
          %537 = vmatpush1.bf16.msra.mxu0 0
          %538 = vmatprep.subr.bf16.mxu0 0
          %539 = vmatpush1.bf16.msra.mxu0 0
          %540 = vmatprep.subr.bf16.mxu0 0
          %541 = vmatpush1.bf16.msra.mxu0 0
          %542 = vmatprep.subr.bf16.mxu0 0
          %543 = vmatpush1.bf16.msra.mxu0 0
          %544 = vmatprep.subr.bf16.mxu0 0
          %545 = vmatpush1.bf16.msra.mxu0 0
          %546 = vmatprep.subr.bf16.mxu0 0
          %547 = vmatpush1.bf16.msra.mxu0 0
          %548 = vmatprep.subr.bf16.mxu0 0
          %549 = vmatpush1.bf16.msra.mxu0 0
          %550 = vmatprep.subr.bf16.mxu0 0
          %551 = vmatpush1.bf16.msra.mxu0 0
          %552 = vmatprep.subr.bf16.mxu0 0
          %553 = vmatpush1.bf16.msra.mxu0 0
          %554 = vmatprep.subr.bf16.mxu0 0
          %555 = vmatpush1.bf16.msra.mxu0 0
          %556 = vmatprep.mubr.bf16.mxu0 0
          %557 = vmatmul.mubr.bf16.gmra.mrb[0].mxu0 %v522
          %v558 = vpop.f32.mrb[0].mxu0
          %v559 = vadd.f32 %v506, %v558
          %v560 = vpop.f32.mrb[0].mxu0
          %v561 = vpop.f32.mrb[0].mxu0
          %v562 = vpop.f32.mrb[0].mxu0
          %563 = vdwg.mxu0
          %v564 = vld [vmem:[#allocation11] sm:$0xf]
          %v565 = vld [vmem:[#allocation11 + $0x4] sm:$0xf]
          %v566 = vld [vmem:[#allocation11 + $0x8] sm:$0xf]
          %v567 = vld [vmem:[#allocation11 + $0xc] sm:$0xf]
          %v568 = vld [vmem:[#allocation16] sm:$0x1]
          %v570 = vlaneseq
          %v571 = vshrl.u32 %v570, 7
          %v572 = vsub.s32 0, %v571
          %v573 = vrot.slane %v568, %v572
          %v579 = vunpack.c.l.b16 %v564
          %v580 = vunpack.c.l.b16 %v565
          %v581 = vunpack.c.l.b16 %v566
          %v582 = vunpack.c.l.b16 %v567
          %v583 = vpack.c.b16 %v580, %v579
          %v584 = vpack.c.b16 %v582, %v581
          %587 = vmatprep.subr.bf16.mxu0 0
          %588 = vmatpush1.bf16.msra.mxu0 %v583
          %589 = vmatprep.subr.bf16.mxu0 0
          %590 = vmatpush1.bf16.msra.mxu0 %v584
          %591 = vmatprep.subr.bf16.mxu0 0
          %592 = vmatpush1.bf16.msra.mxu0 0
          %593 = vmatprep.subr.bf16.mxu0 0
          %594 = vmatpush1.bf16.msra.mxu0 0
          %595 = vmatprep.subr.bf16.mxu0 0
          %596 = vmatpush1.bf16.msra.mxu0 0
          %597 = vmatprep.subr.bf16.mxu0 0
          %598 = vmatpush1.bf16.msra.mxu0 0
          %599 = vmatprep.subr.bf16.mxu0 0
          %600 = vmatpush1.bf16.msra.mxu0 0
          %601 = vmatprep.subr.bf16.mxu0 0
          %602 = vmatpush1.bf16.msra.mxu0 0
          %603 = vmatprep.subr.bf16.mxu0 0
          %604 = vmatpush1.bf16.msra.mxu0 0
          %605 = vmatprep.subr.bf16.mxu0 0
          %606 = vmatpush1.bf16.msra.mxu0 0
          %607 = vmatprep.subr.bf16.mxu0 0
          %608 = vmatpush1.bf16.msra.mxu0 0
          %609 = vmatprep.subr.bf16.mxu0 0
          %610 = vmatpush1.bf16.msra.mxu0 0
          %611 = vmatprep.subr.bf16.mxu0 0
          %612 = vmatpush1.bf16.msra.mxu0 0
          %613 = vmatprep.subr.bf16.mxu0 0
          %614 = vmatpush1.bf16.msra.mxu0 0
          %615 = vmatprep.subr.bf16.mxu0 0
          %616 = vmatpush1.bf16.msra.mxu0 0
          %617 = vmatprep.subr.bf16.mxu0 0
          %618 = vmatpush1.bf16.msra.mxu0 0
          %619 = vmatprep.mubr.bf16.mxu0 0
          %620 = vmatmul.mubr.bf16.gmra.mrb[0].mxu0 %v522
          %v621 = vpop.f32.mrb[0].mxu0
          %v622 = vadd.f32 %v573, %v621
          %v623 = vpop.f32.mrb[0].mxu0
          %v624 = vpop.f32.mrb[0].mxu0
          %v625 = vpop.f32.mrb[0].mxu0
          %626 = vdwg.mxu0
          %v627 = vpack.c.bf16 %v559, %v559
          %s628 = smul.addr %s36, 4
          %s629 = scalar_lea.vmem [#allocation2], %s628
          %vm630 = vcmask 257024
          %631 = vst.msk [vmem:[%s629] sm:$0xf] %vm630, %v627
          %v632 = vpack.c.bf16 %v622, %v622
          %s633 = smul.addr %s36, 4
          %s634 = scalar_lea.vmem [#allocation3], %s633
          %635 = vst.msk [vmem:[%s634] sm:$0xf] %vm630, %v632
        $region88: #{tpu_custom_call.1} parent=51 // pred_fallthru
          _
        %p636 = scmp.eq.s32.totalorder %s36, 0
        // Predicated region
        $region89: #{tpu_custom_call.1} parent=51 // pred_check
          %p637 = pneg %p636
        $region90: #{tpu_custom_call.1} parent=51 // pred_check_branch
          %639 = sbr.rel (%p637) target = $region92
        $region91: #{tpu_custom_call.1} parent=51 // pred_region
          %vm640 = vcmask 261120
          %641 = vst.msk [vmem:[#allocation4] sm:$0xff] %vm640, 0.0
        $region92: #{tpu_custom_call.1} parent=51 // pred_fallthru
          _
        %s642 = smul.u32 %s35, 8
        %s643 = sshra.s32 %s642, 3
        %s644 = sand.u32 %s642, 7
        %s645 = smul.addr %s643, 4
        %s646 = scalar_lea.vmem %s430, %s645 [#allocation5]
        %v647 = vld [vmem:[%s646] sm:$0xf]
        %v648 = vld [vmem:[#allocation8] sm:$0xf]
        %v649 = vld [vmem:[#allocation8 + $0x4] sm:$0xf]
        %v650 = vld [vmem:[#allocation8 + $0x8] sm:$0xf]
        %v651 = vld [vmem:[#allocation8 + $0xc] sm:$0xf]
        %v652 = vld [vmem:[#allocation13] sm:$0x1]
        %v654 = vlaneseq
        %v655 = vshrl.u32 %v654, 7
        %v656 = vsub.s32 0, %v655
        %v657 = vrot.slane %v652, %v656
        %v663 = vunpack.c.l.b16 %v648
        %v664 = vunpack.c.l.b16 %v649
        %v665 = vunpack.c.l.b16 %v650
        %v666 = vunpack.c.l.b16 %v651
        %v667 = vpack.c.b16 %v664, %v663
        %v668 = vpack.c.b16 %v666, %v665
        %vm671 = vcmask 261120
        %v673 = vsel %vm671, %v647, 0
        %675 = vmatprep.subr.bf16.mxu0 0
        %676 = vmatpush1.bf16.msra.mxu0 %v667
        %677 = vmatprep.subr.bf16.mxu0 0
        %678 = vmatpush1.bf16.msra.mxu0 %v668
        %679 = vmatprep.subr.bf16.mxu0 0
        %680 = vmatpush1.bf16.msra.mxu0 0
        %681 = vmatprep.subr.bf16.mxu0 0
        %682 = vmatpush1.bf16.msra.mxu0 0
        %683 = vmatprep.subr.bf16.mxu0 0
        %684 = vmatpush1.bf16.msra.mxu0 0
        %685 = vmatprep.subr.bf16.mxu0 0
        %686 = vmatpush1.bf16.msra.mxu0 0
        %687 = vmatprep.subr.bf16.mxu0 0
        %688 = vmatpush1.bf16.msra.mxu0 0
        %689 = vmatprep.subr.bf16.mxu0 0
        %690 = vmatpush1.bf16.msra.mxu0 0
        %691 = vmatprep.subr.bf16.mxu0 0
        %692 = vmatpush1.bf16.msra.mxu0 0
        %693 = vmatprep.subr.bf16.mxu0 0
        %694 = vmatpush1.bf16.msra.mxu0 0
        %695 = vmatprep.subr.bf16.mxu0 0
        %696 = vmatpush1.bf16.msra.mxu0 0
        %697 = vmatprep.subr.bf16.mxu0 0
        %698 = vmatpush1.bf16.msra.mxu0 0
        %699 = vmatprep.subr.bf16.mxu0 0
        %700 = vmatpush1.bf16.msra.mxu0 0
        %701 = vmatprep.subr.bf16.mxu0 0
        %702 = vmatpush1.bf16.msra.mxu0 0
        %703 = vmatprep.subr.bf16.mxu0 0
        %704 = vmatpush1.bf16.msra.mxu0 0
        %705 = vmatprep.subr.bf16.mxu0 0
        %706 = vmatpush1.bf16.msra.mxu0 0
        %707 = vmatprep.mubr.bf16.mxu0 0
        %708 = vmatmul.mubr.bf16.gmra.mrb[0].mxu0 %v673
        %v709 = vpop.f32.mrb[0].mxu0
        %v710 = vadd.f32 %v657, %v709
        %v711 = vpop.f32.mrb[0].mxu0
        %v712 = vpop.f32.mrb[0].mxu0
        %v713 = vpop.f32.mrb[0].mxu0
        %714 = vdwg.mxu0
        %v715 = vpack.c.bf16 %v710, %v710
        %s716 = smul.addr %s36, 4
        %s717 = scalar_lea.vmem [#allocation2], %s716
        %v718 = vld [vmem:[%s717] sm:$0xf]
        %s719 = smul.addr %s36, 4
        %s720 = scalar_lea.vmem [#allocation3], %s719
        %v721 = vld [vmem:[%s720] sm:$0xf]
        %vm722 = vcmask 64512
        %v724 = vsel %vm722, %v715, 0
        %v727 = vsel %vm722, %v718, 0
        %729 = vmatprep.subr.bf16.mxu0 0
        %730 = vmatpush1.bf16.xpose.msra.mxu0 %v727
        %731 = vmatprep.subr.bf16.mxu0 0
        %732 = vmatpush1.bf16.xpose.msra.mxu0 0
        %733 = vmatprep.subr.bf16.mxu0 0
        %734 = vmatpush1.bf16.xpose.msra.mxu0 0
        %735 = vmatprep.subr.bf16.mxu0 0
        %736 = vmatpush1.bf16.xpose.msra.mxu0 0
        %737 = vmatprep.subr.bf16.mxu0 0
        %738 = vmatpush1.bf16.xpose.msra.mxu0 0
        %739 = vmatprep.subr.bf16.mxu0 0
        %740 = vmatpush1.bf16.xpose.msra.mxu0 0
        %741 = vmatprep.subr.bf16.mxu0 0
        %742 = vmatpush1.bf16.xpose.msra.mxu0 0
        %743 = vmatprep.subr.bf16.mxu0 0
        %744 = vmatpush1.bf16.xpose.msra.mxu0 0
        %745 = vmatprep.subr.bf16.mxu0 0
        %746 = vmatpush1.bf16.xpose.msra.mxu0 0
        %747 = vmatprep.subr.bf16.mxu0 0
        %748 = vmatpush1.bf16.xpose.msra.mxu0 0
        %749 = vmatprep.subr.bf16.mxu0 0
        %750 = vmatpush1.bf16.xpose.msra.mxu0 0
        %751 = vmatprep.subr.bf16.mxu0 0
        %752 = vmatpush1.bf16.xpose.msra.mxu0 0
        %753 = vmatprep.subr.bf16.mxu0 0
        %754 = vmatpush1.bf16.xpose.msra.mxu0 0
        %755 = vmatprep.subr.bf16.mxu0 0
        %756 = vmatpush1.bf16.xpose.msra.mxu0 0
        %757 = vmatprep.subr.bf16.mxu0 0
        %758 = vmatpush1.bf16.xpose.msra.mxu0 0
        %759 = vmatprep.subr.bf16.mxu0 0
        %760 = vmatpush1.bf16.xpose.msra.mxu0 0
        %761 = vmatprep.mubr.bf16.mxu0 0
        %762 = vmatmul.mubr.bf16.gmra.mrb[0].mxu0 %v724
        %v763 = vpop.f32.mrb[0].mxu0
        %v764 = vadd.f32 0.0, %v763
        %v765 = vpop.f32.mrb[0].mxu0
        %v766 = vpop.f32.mrb[0].mxu0
        %v767 = vpop.f32.mrb[0].mxu0
        %768 = vdwg.mxu0
        %v769 = vsel %vm722, %v764, -inf
        %770 = vmax.xlane.f32.xlu0 %v769
        %v771 = vpop.xlane.xlu0 %770
        %v772 = vsub.f32 %v764, %v771
        %v773 = vmul.f32 %v772, 1.442695
        %v774 = vpow.pop %v773
        %v775 = vsel %vm722, %v774, 0.0
        %776 = vadd.xlane.f32.xlu0 %v775
        %v777 = vpop.xlane.xlu0 %776
        %v778 = vrcp.pop %v777
        %v779 = vmul.f32 %v774, %v778
        %v780 = vpack.c.bf16 %v779, %v779
        %v782 = vsel %vm722, %v780, 0
        %vm784 = vcmask 1043456
        %v786 = vsel %vm784, %v721, 0
        %788 = vmatprep.subr.bf16.mxu0 0
        %789 = vmatpush1.bf16.msra.mxu0 %v786
        %790 = vmatprep.subr.bf16.mxu0 0
        %791 = vmatpush1.bf16.msra.mxu0 0
        %792 = vmatprep.subr.bf16.mxu0 0
        %793 = vmatpush1.bf16.msra.mxu0 0
        %794 = vmatprep.subr.bf16.mxu0 0
        %795 = vmatpush1.bf16.msra.mxu0 0
        %796 = vmatprep.subr.bf16.mxu0 0
        %797 = vmatpush1.bf16.msra.mxu0 0
        %798 = vmatprep.subr.bf16.mxu0 0
        %799 = vmatpush1.bf16.msra.mxu0 0
        %800 = vmatprep.subr.bf16.mxu0 0
        %801 = vmatpush1.bf16.msra.mxu0 0
        %802 = vmatprep.subr.bf16.mxu0 0
        %803 = vmatpush1.bf16.msra.mxu0 0
        %804 = vmatprep.subr.bf16.mxu0 0
        %805 = vmatpush1.bf16.msra.mxu0 0
        %806 = vmatprep.subr.bf16.mxu0 0
        %807 = vmatpush1.bf16.msra.mxu0 0
        %808 = vmatprep.subr.bf16.mxu0 0
        %809 = vmatpush1.bf16.msra.mxu0 0
        %810 = vmatprep.subr.bf16.mxu0 0
        %811 = vmatpush1.bf16.msra.mxu0 0
        %812 = vmatprep.subr.bf16.mxu0 0
        %813 = vmatpush1.bf16.msra.mxu0 0
        %814 = vmatprep.subr.bf16.mxu0 0
        %815 = vmatpush1.bf16.msra.mxu0 0
        %816 = vmatprep.subr.bf16.mxu0 0
        %817 = vmatpush1.bf16.msra.mxu0 0
        %818 = vmatprep.subr.bf16.mxu0 0
        %819 = vmatpush1.bf16.msra.mxu0 0
        %820 = vmatprep.mubr.bf16.mxu0 0
        %821 = vmatmul.mubr.bf16.gmra.mrb[0].mxu0 %v782
        %v822 = vpop.f32.mrb[0].mxu0
        %v823 = vadd.f32 0.0, %v822
        %v824 = vpop.f32.mrb[0].mxu0
        %v825 = vpop.f32.mrb[0].mxu0
        %v826 = vpop.f32.mrb[0].mxu0
        %827 = vdwg.mxu0
        %829 = vrot.lane.b32.xlu0 %v715, 120
        %v830 = vpop.permute.xlu0 %829
        %v832 = vunpack.c.l.b16 %v718
        %v833 = vpack.c.b16 %v832, %v832
        %834 = vrot.lane.b32.xlu0 %v833, 120
        %v835 = vpop.permute.xlu0 %834
        %v837 = vsel %vm722, %v830, 0
        %v840 = vsel %vm722, %v835, 0
        %842 = vmatprep.subr.bf16.mxu0 0
        %843 = vmatpush1.bf16.xpose.msra.mxu0 %v840
        %844 = vmatprep.subr.bf16.mxu0 0
        %845 = vmatpush1.bf16.xpose.msra.mxu0 0
        %846 = vmatprep.subr.bf16.mxu0 0
        %847 = vmatpush1.bf16.xpose.msra.mxu0 0
        %848 = vmatprep.subr.bf16.mxu0 0
        %849 = vmatpush1.bf16.xpose.msra.mxu0 0
        %850 = vmatprep.subr.bf16.mxu0 0
        %851 = vmatpush1.bf16.xpose.msra.mxu0 0
        %852 = vmatprep.subr.bf16.mxu0 0
        %853 = vmatpush1.bf16.xpose.msra.mxu0 0
        %854 = vmatprep.subr.bf16.mxu0 0
        %855 = vmatpush1.bf16.xpose.msra.mxu0 0
        %856 = vmatprep.subr.bf16.mxu0 0
        %857 = vmatpush1.bf16.xpose.msra.mxu0 0
        %858 = vmatprep.subr.bf16.mxu0 0
        %859 = vmatpush1.bf16.xpose.msra.mxu0 0
        %860 = vmatprep.subr.bf16.mxu0 0
        %861 = vmatpush1.bf16.xpose.msra.mxu0 0
        %862 = vmatprep.subr.bf16.mxu0 0
        %863 = vmatpush1.bf16.xpose.msra.mxu0 0
        %864 = vmatprep.subr.bf16.mxu0 0
        %865 = vmatpush1.bf16.xpose.msra.mxu0 0
        %866 = vmatprep.subr.bf16.mxu0 0
        %867 = vmatpush1.bf16.xpose.msra.mxu0 0
        %868 = vmatprep.subr.bf16.mxu0 0
        %869 = vmatpush1.bf16.xpose.msra.mxu0 0
        %870 = vmatprep.subr.bf16.mxu0 0
        %871 = vmatpush1.bf16.xpose.msra.mxu0 0
        %872 = vmatprep.subr.bf16.mxu0 0
        %873 = vmatpush1.bf16.xpose.msra.mxu0 0
        %874 = vmatprep.mubr.bf16.mxu0 0
        %875 = vmatmul.mubr.bf16.gmra.mrb[0].mxu0 %v837
        %v876 = vpop.f32.mrb[0].mxu0
        %v877 = vadd.f32 0.0, %v876
        %v878 = vpop.f32.mrb[0].mxu0
        %v879 = vpop.f32.mrb[0].mxu0
        %v880 = vpop.f32.mrb[0].mxu0
        %881 = vdwg.mxu0
        %v882 = vsel %vm722, %v877, -inf
        %883 = vmax.xlane.f32.xlu0 %v882
        %v884 = vpop.xlane.xlu0 %883
        %v885 = vsub.f32 %v877, %v884
        %v886 = vmul.f32 %v885, 1.442695
        %v887 = vpow.pop %v886
        %v888 = vsel %vm722, %v887, 0.0
        %889 = vadd.xlane.f32.xlu0 %v888
        %v890 = vpop.xlane.xlu0 %889
        %v891 = vrcp.pop %v890
        %v892 = vmul.f32 %v887, %v891
        %v893 = vpack.c.bf16 %v892, %v892
        %v895 = vunpack.c.l.b16 %v721
        %v896 = vpack.c.b16 %v895, %v895
        %897 = vrot.lane.b32.xlu0 %v896, 120
        %v898 = vpop.permute.xlu0 %897
        %v900 = vsel %vm722, %v893, 0
        %v903 = vsel %vm784, %v898, 0
        %905 = vmatprep.subr.bf16.mxu0 0
        %906 = vmatpush1.bf16.msra.mxu0 %v903
        %907 = vmatprep.subr.bf16.mxu0 0
        %908 = vmatpush1.bf16.msra.mxu0 0
        %909 = vmatprep.subr.bf16.mxu0 0
        %910 = vmatpush1.bf16.msra.mxu0 0
        %911 = vmatprep.subr.bf16.mxu0 0
        %912 = vmatpush1.bf16.msra.mxu0 0
        %913 = vmatprep.subr.bf16.mxu0 0
        %914 = vmatpush1.bf16.msra.mxu0 0
        %915 = vmatprep.subr.bf16.mxu0 0
        %916 = vmatpush1.bf16.msra.mxu0 0
        %917 = vmatprep.subr.bf16.mxu0 0
        %918 = vmatpush1.bf16.msra.mxu0 0
        %919 = vmatprep.subr.bf16.mxu0 0
        %920 = vmatpush1.bf16.msra.mxu0 0
        %921 = vmatprep.subr.bf16.mxu0 0
        %922 = vmatpush1.bf16.msra.mxu0 0
        %923 = vmatprep.subr.bf16.mxu0 0
        %924 = vmatpush1.bf16.msra.mxu0 0
        %925 = vmatprep.subr.bf16.mxu0 0
        %926 = vmatpush1.bf16.msra.mxu0 0
        %927 = vmatprep.subr.bf16.mxu0 0
        %928 = vmatpush1.bf16.msra.mxu0 0
        %929 = vmatprep.subr.bf16.mxu0 0
        %930 = vmatpush1.bf16.msra.mxu0 0
        %931 = vmatprep.subr.bf16.mxu0 0
        %932 = vmatpush1.bf16.msra.mxu0 0
        %933 = vmatprep.subr.bf16.mxu0 0
        %934 = vmatpush1.bf16.msra.mxu0 0
        %935 = vmatprep.subr.bf16.mxu0 0
        %936 = vmatpush1.bf16.msra.mxu0 0
        %937 = vmatprep.mubr.bf16.mxu0 0
        %938 = vmatmul.mubr.bf16.gmra.mrb[0].mxu0 %v900
        %v939 = vpop.f32.mrb[0].mxu0
        %v940 = vadd.f32 0.0, %v939
        %v941 = vpop.f32.mrb[0].mxu0
        %v942 = vpop.f32.mrb[0].mxu0
        %v943 = vpop.f32.mrb[0].mxu0
        %944 = vdwg.mxu0
        %945 = vrot.lane.b32.xlu0 %v715, 112
        %v946 = vpop.permute.xlu0 %945
        %947 = vrot.lane.b32.xlu0 %v833, 112
        %v948 = vpop.permute.xlu0 %947
        %v950 = vsel %vm722, %v946, 0
        %v953 = vsel %vm722, %v948, 0
        %955 = vmatprep.subr.bf16.mxu0 0
        %956 = vmatpush1.bf16.xpose.msra.mxu0 %v953
        %957 = vmatprep.subr.bf16.mxu0 0
        %958 = vmatpush1.bf16.xpose.msra.mxu0 0
        %959 = vmatprep.subr.bf16.mxu0 0
        %960 = vmatpush1.bf16.xpose.msra.mxu0 0
        %961 = vmatprep.subr.bf16.mxu0 0
        %962 = vmatpush1.bf16.xpose.msra.mxu0 0
        %963 = vmatprep.subr.bf16.mxu0 0
        %964 = vmatpush1.bf16.xpose.msra.mxu0 0
        %965 = vmatprep.subr.bf16.mxu0 0
        %966 = vmatpush1.bf16.xpose.msra.mxu0 0
        %967 = vmatprep.subr.bf16.mxu0 0
        %968 = vmatpush1.bf16.xpose.msra.mxu0 0
        %969 = vmatprep.subr.bf16.mxu0 0
        %970 = vmatpush1.bf16.xpose.msra.mxu0 0
        %971 = vmatprep.subr.bf16.mxu0 0
        %972 = vmatpush1.bf16.xpose.msra.mxu0 0
        %973 = vmatprep.subr.bf16.mxu0 0
        %974 = vmatpush1.bf16.xpose.msra.mxu0 0
        %975 = vmatprep.subr.bf16.mxu0 0
        %976 = vmatpush1.bf16.xpose.msra.mxu0 0
        %977 = vmatprep.subr.bf16.mxu0 0
        %978 = vmatpush1.bf16.xpose.msra.mxu0 0
        %979 = vmatprep.subr.bf16.mxu0 0
        %980 = vmatpush1.bf16.xpose.msra.mxu0 0
        %981 = vmatprep.subr.bf16.mxu0 0
        %982 = vmatpush1.bf16.xpose.msra.mxu0 0
        %983 = vmatprep.subr.bf16.mxu0 0
        %984 = vmatpush1.bf16.xpose.msra.mxu0 0
        %985 = vmatprep.subr.bf16.mxu0 0
        %986 = vmatpush1.bf16.xpose.msra.mxu0 0
        %987 = vmatprep.mubr.bf16.mxu0 0
        %988 = vmatmul.mubr.bf16.gmra.mrb[0].mxu0 %v950
        %v989 = vpop.f32.mrb[0].mxu0
        %v990 = vadd.f32 0.0, %v989
        %v991 = vpop.f32.mrb[0].mxu0
        %v992 = vpop.f32.mrb[0].mxu0
        %v993 = vpop.f32.mrb[0].mxu0
        %994 = vdwg.mxu0
        %v995 = vsel %vm722, %v990, -inf
        %996 = vmax.xlane.f32.xlu0 %v995
        %v997 = vpop.xlane.xlu0 %996
        %v998 = vsub.f32 %v990, %v997
        %v999 = vmul.f32 %v998, 1.442695
        %v1000 = vpow.pop %v999
        %v1001 = vsel %vm722, %v1000, 0.0
        %1002 = vadd.xlane.f32.xlu0 %v1001
        %v1003 = vpop.xlane.xlu0 %1002
        %v1004 = vrcp.pop %v1003
        %v1005 = vmul.f32 %v1000, %v1004
        %v1006 = vpack.c.bf16 %v1005, %v1005
        %1007 = vrot.lane.b32.xlu0 %v896, 112
        %v1008 = vpop.permute.xlu0 %1007
        %v1010 = vsel %vm722, %v1006, 0
        %v1013 = vsel %vm784, %v1008, 0
        %1015 = vmatprep.subr.bf16.mxu0 0
        %1016 = vmatpush1.bf16.msra.mxu0 %v1013
        %1017 = vmatprep.subr.bf16.mxu0 0
        %1018 = vmatpush1.bf16.msra.mxu0 0
        %1019 = vmatprep.subr.bf16.mxu0 0
        %1020 = vmatpush1.bf16.msra.mxu0 0
        %1021 = vmatprep.subr.bf16.mxu0 0
        %1022 = vmatpush1.bf16.msra.mxu0 0
        %1023 = vmatprep.subr.bf16.mxu0 0
        %1024 = vmatpush1.bf16.msra.mxu0 0
        %1025 = vmatprep.subr.bf16.mxu0 0
        %1026 = vmatpush1.bf16.msra.mxu0 0
        %1027 = vmatprep.subr.bf16.mxu0 0
        %1028 = vmatpush1.bf16.msra.mxu0 0
        %1029 = vmatprep.subr.bf16.mxu0 0
        %1030 = vmatpush1.bf16.msra.mxu0 0
        %1031 = vmatprep.subr.bf16.mxu0 0
        %1032 = vmatpush1.bf16.msra.mxu0 0
        %1033 = vmatprep.subr.bf16.mxu0 0
        %1034 = vmatpush1.bf16.msra.mxu0 0
        %1035 = vmatprep.subr.bf16.mxu0 0
        %1036 = vmatpush1.bf16.msra.mxu0 0
        %1037 = vmatprep.subr.bf16.mxu0 0
        %1038 = vmatpush1.bf16.msra.mxu0 0
        %1039 = vmatprep.subr.bf16.mxu0 0
        %1040 = vmatpush1.bf16.msra.mxu0 0
        %1041 = vmatprep.subr.bf16.mxu0 0
        %1042 = vmatpush1.bf16.msra.mxu0 0
        %1043 = vmatprep.subr.bf16.mxu0 0
        %1044 = vmatpush1.bf16.msra.mxu0 0
        %1045 = vmatprep.subr.bf16.mxu0 0
        %1046 = vmatpush1.bf16.msra.mxu0 0
        %1047 = vmatprep.mubr.bf16.mxu0 0
        %1048 = vmatmul.mubr.bf16.gmra.mrb[0].mxu0 %v1010
        %v1049 = vpop.f32.mrb[0].mxu0
        %v1050 = vadd.f32 0.0, %v1049
        %v1051 = vpop.f32.mrb[0].mxu0
        %v1052 = vpop.f32.mrb[0].mxu0
        %v1053 = vpop.f32.mrb[0].mxu0
        %1054 = vdwg.mxu0
        %1055 = vrot.lane.b32.xlu0 %v715, 104
        %v1056 = vpop.permute.xlu0 %1055
        %1057 = vrot.lane.b32.xlu0 %v833, 104
        %v1058 = vpop.permute.xlu0 %1057
        %v1060 = vsel %vm722, %v1056, 0
        %v1063 = vsel %vm722, %v1058, 0
        %1065 = vmatprep.subr.bf16.mxu0 0
        %1066 = vmatpush1.bf16.xpose.msra.mxu0 %v1063
        %1067 = vmatprep.subr.bf16.mxu0 0
        %1068 = vmatpush1.bf16.xpose.msra.mxu0 0
        %1069 = vmatprep.subr.bf16.mxu0 0
        %1070 = vmatpush1.bf16.xpose.msra.mxu0 0
        %1071 = vmatprep.subr.bf16.mxu0 0
        %1072 = vmatpush1.bf16.xpose.msra.mxu0 0
        %1073 = vmatprep.subr.bf16.mxu0 0
        %1074 = vmatpush1.bf16.xpose.msra.mxu0 0
        %1075 = vmatprep.subr.bf16.mxu0 0
        %1076 = vmatpush1.bf16.xpose.msra.mxu0 0
        %1077 = vmatprep.subr.bf16.mxu0 0
        %1078 = vmatpush1.bf16.xpose.msra.mxu0 0
        %1079 = vmatprep.subr.bf16.mxu0 0
        %1080 = vmatpush1.bf16.xpose.msra.mxu0 0
        %1081 = vmatprep.subr.bf16.mxu0 0
        %1082 = vmatpush1.bf16.xpose.msra.mxu0 0
        %1083 = vmatprep.subr.bf16.mxu0 0
        %1084 = vmatpush1.bf16.xpose.msra.mxu0 0
        %1085 = vmatprep.subr.bf16.mxu0 0
        %1086 = vmatpush1.bf16.xpose.msra.mxu0 0
        %1087 = vmatprep.subr.bf16.mxu0 0
        %1088 = vmatpush1.bf16.xpose.msra.mxu0 0
        %1089 = vmatprep.subr.bf16.mxu0 0
        %1090 = vmatpush1.bf16.xpose.msra.mxu0 0
        %1091 = vmatprep.subr.bf16.mxu0 0
        %1092 = vmatpush1.bf16.xpose.msra.mxu0 0
        %1093 = vmatprep.subr.bf16.mxu0 0
        %1094 = vmatpush1.bf16.xpose.msra.mxu0 0
        %1095 = vmatprep.subr.bf16.mxu0 0
        %1096 = vmatpush1.bf16.xpose.msra.mxu0 0
        %1097 = vmatprep.mubr.bf16.mxu0 0
        %1098 = vmatmul.mubr.bf16.gmra.mrb[0].mxu0 %v1060
        %v1099 = vpop.f32.mrb[0].mxu0
        %v1100 = vadd.f32 0.0, %v1099
        %v1101 = vpop.f32.mrb[0].mxu0
        %v1102 = vpop.f32.mrb[0].mxu0
        %v1103 = vpop.f32.mrb[0].mxu0
        %1104 = vdwg.mxu0
        %v1105 = vsel %vm722, %v1100, -inf
        %1106 = vmax.xlane.f32.xlu0 %v1105
        %v1107 = vpop.xlane.xlu0 %1106
        %v1108 = vsub.f32 %v1100, %v1107
        %v1109 = vmul.f32 %v1108, 1.442695
        %v1110 = vpow.pop %v1109
        %v1111 = vsel %vm722, %v1110, 0.0
        %1112 = vadd.xlane.f32.xlu0 %v1111
        %v1113 = vpop.xlane.xlu0 %1112
        %v1114 = vrcp.pop %v1113
        %v1115 = vmul.f32 %v1110, %v1114
        %v1116 = vpack.c.bf16 %v1115, %v1115
        %1117 = vrot.lane.b32.xlu0 %v896, 104
        %v1118 = vpop.permute.xlu0 %1117
        %v1120 = vsel %vm722, %v1116, 0
        %v1123 = vsel %vm784, %v1118, 0
        %1125 = vmatprep.subr.bf16.mxu0 0
        %1126 = vmatpush1.bf16.msra.mxu0 %v1123
        %1127 = vmatprep.subr.bf16.mxu0 0
        %1128 = vmatpush1.bf16.msra.mxu0 0
        %1129 = vmatprep.subr.bf16.mxu0 0
        %1130 = vmatpush1.bf16.msra.mxu0 0
        %1131 = vmatprep.subr.bf16.mxu0 0
        %1132 = vmatpush1.bf16.msra.mxu0 0
        %1133 = vmatprep.subr.bf16.mxu0 0
        %1134 = vmatpush1.bf16.msra.mxu0 0
        %1135 = vmatprep.subr.bf16.mxu0 0
        %1136 = vmatpush1.bf16.msra.mxu0 0
        %1137 = vmatprep.subr.bf16.mxu0 0
        %1138 = vmatpush1.bf16.msra.mxu0 0
        %1139 = vmatprep.subr.bf16.mxu0 0
        %1140 = vmatpush1.bf16.msra.mxu0 0
        %1141 = vmatprep.subr.bf16.mxu0 0
        %1142 = vmatpush1.bf16.msra.mxu0 0
        %1143 = vmatprep.subr.bf16.mxu0 0
        %1144 = vmatpush1.bf16.msra.mxu0 0
        %1145 = vmatprep.subr.bf16.mxu0 0
        %1146 = vmatpush1.bf16.msra.mxu0 0
        %1147 = vmatprep.subr.bf16.mxu0 0
        %1148 = vmatpush1.bf16.msra.mxu0 0
        %1149 = vmatprep.subr.bf16.mxu0 0
        %1150 = vmatpush1.bf16.msra.mxu0 0
        %1151 = vmatprep.subr.bf16.mxu0 0
        %1152 = vmatpush1.bf16.msra.mxu0 0
        %1153 = vmatprep.subr.bf16.mxu0 0
        %1154 = vmatpush1.bf16.msra.mxu0 0
        %1155 = vmatprep.subr.bf16.mxu0 0
        %1156 = vmatpush1.bf16.msra.mxu0 0
        %1157 = vmatprep.mubr.bf16.mxu0 0
        %1158 = vmatmul.mubr.bf16.gmra.mrb[0].mxu0 %v1120
        %v1159 = vpop.f32.mrb[0].mxu0
        %v1160 = vadd.f32 0.0, %v1159
        %v1161 = vpop.f32.mrb[0].mxu0
        %v1162 = vpop.f32.mrb[0].mxu0
        %v1163 = vpop.f32.mrb[0].mxu0
        %1164 = vdwg.mxu0
        %1166 = vrot.lane.b32.xlu0 %v940, 8
        %v1167 = vpop.permute.xlu0 %1166
        %1170 = vrot.lane.b32.xlu0 %v1050, 16
        %v1171 = vpop.permute.xlu0 %1170
        %1174 = vrot.lane.b32.xlu0 %v1160, 24
        %v1175 = vpop.permute.xlu0 %1174
        %v1177 = vsel %vm722, %v823, %v1167
        %vm1178 = vcmask 130048
        %v1179 = vsel %vm1178, %v1177, %v1171
        %vm1180 = vcmask 195584
        %v1181 = vsel %vm1180, %v1179, %v1175
        %v1182 = vpack.c.bf16 %v1181, %v1181
        %v1183 = vld [vmem:[#allocation4] sm:$0xff]
        %v1184 = vld [vmem:[#allocation17] sm:$0xf]
        %v1185 = vld [vmem:[#allocation17 + $0x4] sm:$0xf]
        %v1186 = vld [vmem:[#allocation17 + $0x8] sm:$0xf]
        %v1187 = vld [vmem:[#allocation17 + $0xc] sm:$0xf]
        %v1192 = vunpack.c.l.b16 %v1184
        %v1193 = vunpack.c.l.b16 %v1185
        %v1194 = vunpack.c.l.b16 %v1186
        %v1195 = vunpack.c.l.b16 %v1187
        %v1196 = vpack.c.b16 %v1193, %v1192
        %v1197 = vpack.c.b16 %v1195, %v1194
        %v1201 = vsel %vm671, %v1182, 0
        %1203 = vmatprep.subr.bf16.mxu0 0
        %1204 = vmatpush1.bf16.msra.mxu0 %v1196
        %1205 = vmatprep.subr.bf16.mxu0 0
        %1206 = vmatpush1.bf16.msra.mxu0 %v1197
        %1207 = vmatprep.subr.bf16.mxu0 0
        %1208 = vmatpush1.bf16.msra.mxu0 0
        %1209 = vmatprep.subr.bf16.mxu0 0
        %1210 = vmatpush1.bf16.msra.mxu0 0
        %1211 = vmatprep.subr.bf16.mxu0 0
        %1212 = vmatpush1.bf16.msra.mxu0 0
        %1213 = vmatprep.subr.bf16.mxu0 0
        %1214 = vmatpush1.bf16.msra.mxu0 0
        %1215 = vmatprep.subr.bf16.mxu0 0
        %1216 = vmatpush1.bf16.msra.mxu0 0
        %1217 = vmatprep.subr.bf16.mxu0 0
        %1218 = vmatpush1.bf16.msra.mxu0 0
        %1219 = vmatprep.subr.bf16.mxu0 0
        %1220 = vmatpush1.bf16.msra.mxu0 0
        %1221 = vmatprep.subr.bf16.mxu0 0
        %1222 = vmatpush1.bf16.msra.mxu0 0
        %1223 = vmatprep.subr.bf16.mxu0 0
        %1224 = vmatpush1.bf16.msra.mxu0 0
        %1225 = vmatprep.subr.bf16.mxu0 0
        %1226 = vmatpush1.bf16.msra.mxu0 0
        %1227 = vmatprep.subr.bf16.mxu0 0
        %1228 = vmatpush1.bf16.msra.mxu0 0
        %1229 = vmatprep.subr.bf16.mxu0 0
        %1230 = vmatpush1.bf16.msra.mxu0 0
        %1231 = vmatprep.subr.bf16.mxu0 0
        %1232 = vmatpush1.bf16.msra.mxu0 0
        %1233 = vmatprep.subr.bf16.mxu0 0
        %1234 = vmatpush1.bf16.msra.mxu0 0
        %1235 = vmatprep.mubr.bf16.mxu0 0
        %1236 = vmatmul.mubr.bf16.gmra.mrb[0].mxu0 %v1201
        %v1237 = vpop.f32.mrb[0].mxu0
        %v1238 = vadd.f32 0.0, %v1237
        %v1239 = vpop.f32.mrb[0].mxu0
        %v1240 = vpop.f32.mrb[0].mxu0
        %v1241 = vpop.f32.mrb[0].mxu0
        %1242 = vdwg.mxu0
        %v1243 = vadd.f32 %v1183, %v1238
        %1244 = vst.msk [vmem:[#allocation4] sm:$0xff] %vm671, %v1243
        // Predicated region
        $region93: #{tpu_custom_call.1} parent=51 // pred_check
          %p1245 = pneg %p636
        $region94: #{tpu_custom_call.1} parent=51 // pred_check_branch
          %1247 = sbr.rel (%p1245) target = $region96
        $region95: #{tpu_custom_call.1} parent=51 // pred_region
          %v1248 = vld [vmem:[#allocation4] sm:$0xff]
          %1249 = vst.msk [vmem:[%s490] sm:$0xff] %vm671, %v1248
        $region96: #{tpu_custom_call.1} parent=51 // pred_fallthru
          _
        %s1250 = sand.u32 %s266, 1
        %s1251 = scalar_lea.sflag [#allocation7], %s1250
        %s1252 = sand.u32 %s266, 1
        %s1253 = smul.addr %s1252, 8
        %s1254 = scalar_lea.vmem [#allocation19], %s1253
        // Predicated region
        $region97: #{tpu_custom_call.1} parent=51 // pred_check
          %p1255 = pneg %p276
        $region98: #{tpu_custom_call.1} parent=51 // pred_check_branch
          %1257 = sbr.rel (%p1255) target = $region100
        $region99: #{tpu_custom_call.1} parent=51 // pred_region
          %s1259 = ssub.s32 128, 128
          %1260 = vsyncadd %s1251, %s1259
          %s1261 = sadd.s32 %s35, %s34
          %s1262 = smul.addr %s1261, 128
          %s1263 = scalar_lea.hbm %s8, %s1262
          %s1265 = sshll.u32 %s1254, 4
          %s1266 = int_to_ptr.vmem [resolvable:$true] %s1265
          %1268 = dma.vmem_to_hbm [thread:$0]  %s1266, 128, %s1263, %s1251
        $region100: #{tpu_custom_call.1} parent=51 // pred_fallthru
          _
      $region52: #{tpu_custom_call.1} parent=5 // pred_fallthru
        _
      %p1269 = scmp.le.s32.totalorder 2, %s24
      // Predicated region
      $region101: #{tpu_custom_call.1} parent=5 // pred_check
        %p1270 = pneg %p1269
      $region102: #{tpu_custom_call.1} parent=5 // pred_check_branch
        %1272 = sbr.rel (%p1270) target = $region104
      $region103: #{tpu_custom_call.1} parent=5 // pred_region
        %s1273 = ssub.s32 %s24, 2
        // Predicated region
        $region105: #{tpu_custom_call.1} parent=103 // pred_check
          %p1274 = pneg %p282
        $region106: #{tpu_custom_call.1} parent=103 // pred_check_branch
          %1276 = sbr.rel (%p1274) target = $region108
        $region107: #{tpu_custom_call.1} parent=103 // pred_region
          %s1277 = sand.u32 %s267, 1
          %s1278 = scalar_lea.sflag [#allocation7], %s1277
          %s1279 = sand.u32 %s267, 1
          %s1280 = smul.addr %s1279, 8
          %s1281 = scalar_lea.vmem [#allocation19], %s1280
          %1282 = dma.done %s1278, 128
        $region108: #{tpu_custom_call.1} parent=103 // pred_fallthru
          _
      $region104: #{tpu_custom_call.1} parent=5 // pred_fallthru
        _
    $region6: #{tpu_custom_call.1} parent=1 // loop_footer
      %s28 = sadd.s32 1, %s24
    $region7: #{tpu_custom_call.1} parent=1 // loop_footer_branch
      %23 = sbr.rel target = $region3
    $region8: #{tpu_custom_call.1} parent=1 // loop_exit
      _
    %1283 = vsyncpa [#allocation6], 1
    %s1284 = scalar_lea.sflag [#allocation6], 1
    %1285 = vsyncpa %s1284, 1
    %1286 = vsyncpa [#allocation9], 1
    %1287 = vsyncpa [#allocation12], 1
    %1288 = vsyncpa [#allocation15], 1
    %1289 = vsyncpa [#allocation18], 1
    %1290 = vsyncpa [#allocation7], 1
    %s1291 = scalar_lea.sflag [#allocation7], 1
    %1292 = vsyncpa %s1291, 1

</llo_original>
